<compile_context>
chip_gen: v7x
topology: tpu7x:2x2x1
jax: 0.10.0
libtpu: 0.0.40
codegen_flags: <defaults>
</compile_context>

<pallas_src>
import functools

import jax
import jax.numpy as jnp
from jax import lax
from jax.experimental import pallas as pl
from jax.experimental.pallas import tpu as pltpu


def _round_up(v, m):
    return -(-v // m) * m


def _spatial_attn_kernel(x_ref, mw_ref, o_ref, *, C, H, W, K, SUB):
    """x_ref: (NB, C, HW); mw_ref: (2*K*K, HW) masked tap weights; o_ref: (NB, HW)."""
    HW = H * W
    KK = K * K
    pad = (K - 1) // 2
    NB = x_ref.shape[0]
    upcast = x_ref.dtype != jnp.float32

    def conv_block(b0, sub):
        # --- fused single-pass channel sum + max (x swept exactly once) ---
        def read_chan(c):
            xc = x_ref[pl.ds(b0, sub), c, :]
            return xc.astype(jnp.float32) if upcast else xc

        if C <= 32:
            s = read_chan(0)
            m = s
            for c in range(1, C):
                xc = read_chan(c)
                s = s + xc
                m = jnp.maximum(m, xc)
        else:
            def chan_body(c, carry):
                s_, m_ = carry
                xc = x_ref[pl.ds(b0, sub), c, :]
                if upcast:
                    xc = xc.astype(jnp.float32)
                return s_ + xc, jnp.maximum(m_, xc)

            x0 = read_chan(0)
            s, m = lax.fori_loop(1, C, chan_body, (x0, x0))

        # avg (the 1/C is pre-folded into the avg weights) and max, stacked so
        # every conv tap needs a single XLU roll.
        stacked = jnp.concatenate([s, m], axis=0)           # (2*sub, HW)

        acc = jnp.zeros((sub, HW), jnp.float32)
        # KxK "same" conv as lane rolls over the flattened spatial axis; SAME
        # zero-padding is already folded into the masked weight rows.
        for kh in range(K):
            dy = kh - pad
            for kw in range(K):
                dx = kw - pad
                t = kh * K + kw
                shift = (-(dy * W + dx)) % HW               # static, non-negative
                rolled = pltpu.roll(stacked, shift, axis=1) if shift else stacked
                mwa = mw_ref[pl.ds(t, 1), :]                # (1, HW) mask * w_avg / C
                mwm = mw_ref[pl.ds(KK + t, 1), :]           # (1, HW) mask * w_max
                acc = acc + rolled[:sub] * mwa + rolled[sub:] * mwm

        o_ref[pl.ds(b0, sub), :] = jax.nn.sigmoid(acc).astype(o_ref.dtype)

    n_full = NB // SUB          # SUB <= NB, so n_full >= 1
    rem = NB - n_full * SUB

    @pl.loop(0, n_full)
    def _(si):
        conv_block(pl.multiple_of(si * SUB, SUB), SUB)

    if rem:                     # only when NB == N and N % SUB != 0
        conv_block(n_full * SUB, rem)


def _masked_conv_weights(conv_w, C, H, W):
    """(1,2,K,K) conv weight -> (2*K*K, H*W) per-tap masked weight rows.

    Row t = kh*K+kw holds the avg-channel tap weight (pre-scaled by 1/C),
    row K*K+t the max-channel tap weight, zeroed wherever the tap's source
    pixel falls outside the image (SAME zero padding).  This removes every
    compare / select from the kernel's tap loop.
    """
    K = conv_w.shape[-1]
    pad = (K - 1) // 2
    HW = H * W
    pos = jnp.arange(HW, dtype=jnp.int32)
    row = pos // W
    col = pos % W
    w = conv_w.reshape(2, K * K).astype(jnp.float32)
    w = w * jnp.array([[1.0 / C], [1.0]], dtype=jnp.float32)   # fold mean's 1/C
    rows_avg, rows_max = [], []
    for kh in range(K):
        dy = kh - pad
        for kw in range(K):
            dx = kw - pad
            t = kh * K + kw
            valid = ((row + dy >= 0) & (row + dy < H) &
                     (col + dx >= 0) & (col + dx < W)).astype(jnp.float32)
            rows_avg.append(valid * w[0, t])
            rows_max.append(valid * w[1, t])
    return jnp.stack(rows_avg + rows_max, axis=0)              # (2*K*K, HW)


@jax.jit
def spatial_attention(x, conv_w):
    """x: (N, C, H, W), conv_w: (1, 2, K, K) -> (N, 1, H, W) f-attention map."""
    N, C, H, W = x.shape
    _, two, K, K2 = conv_w.shape
    assert two == 2 and K == K2
    HW = H * W
    hw_pad = _round_up(HW, 128)
    c_pad = _round_up(C, 8)       # NOTE: C < 8 pads the input sublane dim (accepted).

    x_flat = x.reshape(N, C, HW)                       # lane-dense spatial axis (free)
    mw = _masked_conv_weights(conv_w, C, H, W)         # tiny, VMEM-resident table

    # ---- batch-block (grid) sizing ----
    bytes_per_img = c_pad * hw_pad * 4
    nb_cap_vmem = max(1, (2 << 20) // bytes_per_img)   # ~2 MiB input DMA tile
    nb_cap_mega = max(1, pl.cdiv(N, 2))                # keep >=2 grid steps (v7x 2 TCs)
    nb = min(N, nb_cap_vmem, nb_cap_mega)
    if nb != N:
        # Output block (nb, HW): keep nb a multiple of 8 (or the full batch) so
        # the sublane dim of the output tile stays aligned / BlockSpec legal.
        nb = (nb // 8) * 8 if nb >= 8 else min(N, 8)
    grid_n = pl.cdiv(N, nb)

    # In-kernel batch sub-chunk: ~5 (SUB, HW) f32 maps (stacked avg/max, their
    # rolled copy, acc) kept within ~32 vregs so the 49-tap loop stays
    # register-resident instead of round-tripping VMEM.
    sub = max(1, min(8, nb, (32 * 4096) // (5 * hw_pad * 4)))

    # VMEM limit from actual needs (+slack); clamp to 64 MiB for v7x's smaller VMEM.
    in_tile = nb * c_pad * hw_pad * 4
    out_tile = _round_up(nb, 8) * hw_pad * 4
    mw_tile = _round_up(2 * K * K, 8) * hw_pad * 4
    vmem_need = 2 * in_tile + 2 * out_tile + 2 * mw_tile + (8 << 20)
    vmem_limit = int(min(max(vmem_need, 16 << 20), 64 << 20))

    kernel = functools.partial(_spatial_attn_kernel, C=C, H=H, W=W, K=K, SUB=sub)

    out_flat = pl.pallas_call(
        kernel,
        out_shape=jax.ShapeDtypeStruct((N, HW), x.dtype),
        grid_spec=pltpu.PrefetchScalarGridSpec(
            num_scalar_prefetch=0,
            grid=(grid_n,),
            in_specs=[
                pl.BlockSpec((nb, C, HW), lambda n: (n, 0, 0)),
                pl.BlockSpec((2 * K * K, HW), lambda n: (0, 0)),  # resident weights
            ],
            out_specs=pl.BlockSpec((nb, HW), lambda n: (n, 0)),
        ),
        compiler_params=pltpu.CompilerParams(
            dimension_semantics=("parallel",),      # batch steps are independent
            vmem_limit_bytes=vmem_limit,
        ),
    )(x_flat, mw)

    return out_flat.reshape(N, 1, H, W)


def _reference(x, conv_w):
    avg = jnp.mean(x, axis=1, keepdims=True)
    mx = jnp.max(x, axis=1, keepdims=True)
    cat = jnp.concatenate([avg, mx], axis=1)
    y = lax.conv_general_dilated(
        cat, conv_w, window_strides=(1, 1), padding="SAME",
        dimension_numbers=("NCHW", "OIHW", "NCHW"))
    return jax.nn.sigmoid(y)


if __name__ == "__main__":
    key = jax.random.PRNGKey(0)
    kx, kw = jax.random.split(key)

    N, C, H, W, K = 2, 4, 16, 16, 7
    x = jax.random.normal(kx, (N, C, H, W), dtype=jnp.float32)
    # Deterministic synthetic conv1 weight (nn.Conv2d(2, 1, 7, bias=False) shape).
    fan_in = 2 * K * K
    conv_w = jax.random.uniform(
        kw, (1, 2, K, K), dtype=jnp.float32,
        minval=-1.0 / fan_in ** 0.5, maxval=1.0 / fan_in ** 0.5)

    out = spatial_attention(x, conv_w)
    out = jax.block_until_ready(out)

    ref = _reference(x, conv_w)
    assert out.shape == (N, 1, H, W)
    if not jnp.allclose(out, ref, atol=1e-5, rtol=1e-5):
        raise AssertionError("Pallas kernel does not match JAX reference")

    print("KERNEL_OK")
</pallas_src>

<mosaic_0001>
module attributes {stable_mosaic.version = 11 : i64} {
  func.func @_spatial_attn_kernel(%arg0: i32, %arg1: memref<2x4x256xf32, #tpu.memory_space<vmem>>, %arg2: memref<98x256xf32, #tpu.memory_space<vmem>>, %arg3: memref<2x256xf32, #tpu.memory_space<vmem>>) attributes {dimension_semantics = [#tpu.dimension_semantics<parallel>], iteration_bounds = array<i64: 1>, scalar_prefetch = 0 : i64, scratch_operands = 0 : i64, tpu.core_type = #tpu.core_type<tc>, window_params = [{transform_indices = @transform_0, window_bounds = array<i64: 2, 4, 256>}, {pipeline_mode = #tpu.pipeline_mode<synchronous>, transform_indices = @transform_1, window_bounds = array<i64: 98, 256>}, {transform_indices = @transform_2, window_bounds = array<i64: 2, 256>}]} {
    %c0_i32 = arith.constant 0 : i32
    %c1_i32 = arith.constant 1 : i32
    %0 = arith.muli %c0_i32, %c1_i32 : i32
    %c0_i32_0 = arith.constant 0 : i32
    %1 = arith.addi %c0_i32_0, %0 : i32
    %c2_i32 = arith.constant 2 : i32
    %2 = arith.muli %1, %c2_i32 : i32
    %3 = tpu.assume_multiple %2, 2 : i32
    %4 = arith.index_cast %3 : i32 to index
    %c0 = arith.constant 0 : index
    %c0_1 = arith.constant 0 : index
    %5 = vector.load %arg1[%4, %c0, %c0_1] : memref<2x4x256xf32, #tpu.memory_space<vmem>>, vector<2x1x256xf32>
    %6 = vector.shape_cast %5 : vector<2x1x256xf32> to vector<2x256xf32>
    %7 = arith.index_cast %3 : i32 to index
    %c1 = arith.constant 1 : index
    %c0_2 = arith.constant 0 : index
    %8 = vector.load %arg1[%7, %c1, %c0_2] : memref<2x4x256xf32, #tpu.memory_space<vmem>>, vector<2x1x256xf32>
    %9 = vector.shape_cast %8 : vector<2x1x256xf32> to vector<2x256xf32>
    %10 = arith.addf %6, %9 : vector<2x256xf32>
    %11 = arith.maximumf %6, %9 : vector<2x256xf32>
    %12 = arith.index_cast %3 : i32 to index
    %c2 = arith.constant 2 : index
    %c0_3 = arith.constant 0 : index
    %13 = vector.load %arg1[%12, %c2, %c0_3] : memref<2x4x256xf32, #tpu.memory_space<vmem>>, vector<2x1x256xf32>
    %14 = vector.shape_cast %13 : vector<2x1x256xf32> to vector<2x256xf32>
    %15 = arith.addf %10, %14 : vector<2x256xf32>
    %16 = arith.maximumf %11, %14 : vector<2x256xf32>
    %17 = arith.index_cast %3 : i32 to index
    %c3 = arith.constant 3 : index
    %c0_4 = arith.constant 0 : index
    %18 = vector.load %arg1[%17, %c3, %c0_4] : memref<2x4x256xf32, #tpu.memory_space<vmem>>, vector<2x1x256xf32>
    %19 = vector.shape_cast %18 : vector<2x1x256xf32> to vector<2x256xf32>
    %20 = arith.addf %15, %19 : vector<2x256xf32>
    %21 = arith.maximumf %16, %19 : vector<2x256xf32>
    %22 = tpu.concatenate %20, %21 in 0 : vector<2x256xf32>, vector<2x256xf32> -> vector<4x256xf32>
    %cst = arith.constant 0.000000e+00 : f32
    %23 = vector.broadcast %cst : f32 to vector<2x256xf32>
    %c51_i32 = arith.constant 51 : i32
    %24 = tpu.dynamic_rotate %22 by %c51_i32 dim 1 : vector<4x256xf32>, i32 -> vector<4x256xf32>
    %c0_5 = arith.constant 0 : index
    %c0_6 = arith.constant 0 : index
    %25 = vector.load %arg2[%c0_5, %c0_6] : memref<98x256xf32, #tpu.memory_space<vmem>>, vector<1x256xf32>
    %c49 = arith.constant 49 : index
    %c0_7 = arith.constant 0 : index
    %26 = vector.load %arg2[%c49, %c0_7] : memref<98x256xf32, #tpu.memory_space<vmem>>, vector<1x256xf32>
    %27 = vector.extract_strided_slice %24 {offsets = [0, 0], sizes = [2, 256], strides = [1, 1]} : vector<4x256xf32> to vector<2x256xf32>
    %28 = vector.broadcast %25 : vector<1x256xf32> to vector<2x256xf32>
    %29 = arith.mulf %27, %28 : vector<2x256xf32>
    %30 = arith.addf %23, %29 : vector<2x256xf32>
    %31 = vector.extract_strided_slice %24 {offsets = [2, 0], sizes = [2, 256], strides = [1, 1]} : vector<4x256xf32> to vector<2x256xf32>
    %32 = vector.broadcast %26 : vector<1x256xf32> to vector<2x256xf32>
    %33 = arith.mulf %31, %32 : vector<2x256xf32>
    %34 = arith.addf %30, %33 : vector<2x256xf32>
    %c50_i32 = arith.constant 50 : i32
    %35 = tpu.dynamic_rotate %22 by %c50_i32 dim 1 : vector<4x256xf32>, i32 -> vector<4x256xf32>
    %c1_8 = arith.constant 1 : index
    %c0_9 = arith.constant 0 : index
    %36 = vector.load %arg2[%c1_8, %c0_9] : memref<98x256xf32, #tpu.memory_space<vmem>>, vector<1x256xf32>
    %c50 = arith.constant 50 : index
    %c0_10 = arith.constant 0 : index
    %37 = vector.load %arg2[%c50, %c0_10] : memref<98x256xf32, #tpu.memory_space<vmem>>, vector<1x256xf32>
    %38 = vector.extract_strided_slice %35 {offsets = [0, 0], sizes = [2, 256], strides = [1, 1]} : vector<4x256xf32> to vector<2x256xf32>
    %39 = vector.broadcast %36 : vector<1x256xf32> to vector<2x256xf32>
    %40 = arith.mulf %38, %39 : vector<2x256xf32>
    %41 = arith.addf %34, %40 : vector<2x256xf32>
    %42 = vector.extract_strided_slice %35 {offsets = [2, 0], sizes = [2, 256], strides = [1, 1]} : vector<4x256xf32> to vector<2x256xf32>
    %43 = vector.broadcast %37 : vector<1x256xf32> to vector<2x256xf32>
    %44 = arith.mulf %42, %43 : vector<2x256xf32>
    %45 = arith.addf %41, %44 : vector<2x256xf32>
    %c49_i32 = arith.constant 49 : i32
    %46 = tpu.dynamic_rotate %22 by %c49_i32 dim 1 : vector<4x256xf32>, i32 -> vector<4x256xf32>
    %c2_11 = arith.constant 2 : index
    %c0_12 = arith.constant 0 : index
    %47 = vector.load %arg2[%c2_11, %c0_12] : memref<98x256xf32, #tpu.memory_space<vmem>>, vector<1x256xf32>
    %c51 = arith.constant 51 : index
    %c0_13 = arith.constant 0 : index
    %48 = vector.load %arg2[%c51, %c0_13] : memref<98x256xf32, #tpu.memory_space<vmem>>, vector<1x256xf32>
    %49 = vector.extract_strided_slice %46 {offsets = [0, 0], sizes = [2, 256], strides = [1, 1]} : vector<4x256xf32> to vector<2x256xf32>
    %50 = vector.broadcast %47 : vector<1x256xf32> to vector<2x256xf32>
    %51 = arith.mulf %49, %50 : vector<2x256xf32>
    %52 = arith.addf %45, %51 : vector<2x256xf32>
    %53 = vector.extract_strided_slice %46 {offsets = [2, 0], sizes = [2, 256], strides = [1, 1]} : vector<4x256xf32> to vector<2x256xf32>
    %54 = vector.broadcast %48 : vector<1x256xf32> to vector<2x256xf32>
    %55 = arith.mulf %53, %54 : vector<2x256xf32>
    %56 = arith.addf %52, %55 : vector<2x256xf32>
    %c48_i32 = arith.constant 48 : i32
    %57 = tpu.dynamic_rotate %22 by %c48_i32 dim 1 : vector<4x256xf32>, i32 -> vector<4x256xf32>
    %c3_14 = arith.constant 3 : index
    %c0_15 = arith.constant 0 : index
    %58 = vector.load %arg2[%c3_14, %c0_15] : memref<98x256xf32, #tpu.memory_space<vmem>>, vector<1x256xf32>
    %c52 = arith.constant 52 : index
    %c0_16 = arith.constant 0 : index
    %59 = vector.load %arg2[%c52, %c0_16] : memref<98x256xf32, #tpu.memory_space<vmem>>, vector<1x256xf32>
    %60 = vector.extract_strided_slice %57 {offsets = [0, 0], sizes = [2, 256], strides = [1, 1]} : vector<4x256xf32> to vector<2x256xf32>
    %61 = vector.broadcast %58 : vector<1x256xf32> to vector<2x256xf32>
    %62 = arith.mulf %60, %61 : vector<2x256xf32>
    %63 = arith.addf %56, %62 : vector<2x256xf32>
    %64 = vector.extract_strided_slice %57 {offsets = [2, 0], sizes = [2, 256], strides = [1, 1]} : vector<4x256xf32> to vector<2x256xf32>
    %65 = vector.broadcast %59 : vector<1x256xf32> to vector<2x256xf32>
    %66 = arith.mulf %64, %65 : vector<2x256xf32>
    %67 = arith.addf %63, %66 : vector<2x256xf32>
    %c47_i32 = arith.constant 47 : i32
    %68 = tpu.dynamic_rotate %22 by %c47_i32 dim 1 : vector<4x256xf32>, i32 -> vector<4x256xf32>
    %c4 = arith.constant 4 : index
    %c0_17 = arith.constant 0 : index
    %69 = vector.load %arg2[%c4, %c0_17] : memref<98x256xf32, #tpu.memory_space<vmem>>, vector<1x256xf32>
    %c53 = arith.constant 53 : index
    %c0_18 = arith.constant 0 : index
    %70 = vector.load %arg2[%c53, %c0_18] : memref<98x256xf32, #tpu.memory_space<vmem>>, vector<1x256xf32>
    %71 = vector.extract_strided_slice %68 {offsets = [0, 0], sizes = [2, 256], strides = [1, 1]} : vector<4x256xf32> to vector<2x256xf32>
    %72 = vector.broadcast %69 : vector<1x256xf32> to vector<2x256xf32>
    %73 = arith.mulf %71, %72 : vector<2x256xf32>
    %74 = arith.addf %67, %73 : vector<2x256xf32>
    %75 = vector.extract_strided_slice %68 {offsets = [2, 0], sizes = [2, 256], strides = [1, 1]} : vector<4x256xf32> to vector<2x256xf32>
    %76 = vector.broadcast %70 : vector<1x256xf32> to vector<2x256xf32>
    %77 = arith.mulf %75, %76 : vector<2x256xf32>
    %78 = arith.addf %74, %77 : vector<2x256xf32>
    %c46_i32 = arith.constant 46 : i32
    %79 = tpu.dynamic_rotate %22 by %c46_i32 dim 1 : vector<4x256xf32>, i32 -> vector<4x256xf32>
    %c5 = arith.constant 5 : index
    %c0_19 = arith.constant 0 : index
    %80 = vector.load %arg2[%c5, %c0_19] : memref<98x256xf32, #tpu.memory_space<vmem>>, vector<1x256xf32>
    %c54 = arith.constant 54 : index
    %c0_20 = arith.constant 0 : index
    %81 = vector.load %arg2[%c54, %c0_20] : memref<98x256xf32, #tpu.memory_space<vmem>>, vector<1x256xf32>
    %82 = vector.extract_strided_slice %79 {offsets = [0, 0], sizes = [2, 256], strides = [1, 1]} : vector<4x256xf32> to vector<2x256xf32>
    %83 = vector.broadcast %80 : vector<1x256xf32> to vector<2x256xf32>
    %84 = arith.mulf %82, %83 : vector<2x256xf32>
    %85 = arith.addf %78, %84 : vector<2x256xf32>
    %86 = vector.extract_strided_slice %79 {offsets = [2, 0], sizes = [2, 256], strides = [1, 1]} : vector<4x256xf32> to vector<2x256xf32>
    %87 = vector.broadcast %81 : vector<1x256xf32> to vector<2x256xf32>
    %88 = arith.mulf %86, %87 : vector<2x256xf32>
    %89 = arith.addf %85, %88 : vector<2x256xf32>
    %c45_i32 = arith.constant 45 : i32
    %90 = tpu.dynamic_rotate %22 by %c45_i32 dim 1 : vector<4x256xf32>, i32 -> vector<4x256xf32>
    %c6 = arith.constant 6 : index
    %c0_21 = arith.constant 0 : index
    %91 = vector.load %arg2[%c6, %c0_21] : memref<98x256xf32, #tpu.memory_space<vmem>>, vector<1x256xf32>
    %c55 = arith.constant 55 : index
    %c0_22 = arith.constant 0 : index
    %92 = vector.load %arg2[%c55, %c0_22] : memref<98x256xf32, #tpu.memory_space<vmem>>, vector<1x256xf32>
    %93 = vector.extract_strided_slice %90 {offsets = [0, 0], sizes = [2, 256], strides = [1, 1]} : vector<4x256xf32> to vector<2x256xf32>
    %94 = vector.broadcast %91 : vector<1x256xf32> to vector<2x256xf32>
    %95 = arith.mulf %93, %94 : vector<2x256xf32>
    %96 = arith.addf %89, %95 : vector<2x256xf32>
    %97 = vector.extract_strided_slice %90 {offsets = [2, 0], sizes = [2, 256], strides = [1, 1]} : vector<4x256xf32> to vector<2x256xf32>
    %98 = vector.broadcast %92 : vector<1x256xf32> to vector<2x256xf32>
    %99 = arith.mulf %97, %98 : vector<2x256xf32>
    %100 = arith.addf %96, %99 : vector<2x256xf32>
    %c35_i32 = arith.constant 35 : i32
    %101 = tpu.dynamic_rotate %22 by %c35_i32 dim 1 : vector<4x256xf32>, i32 -> vector<4x256xf32>
    %c7 = arith.constant 7 : index
    %c0_23 = arith.constant 0 : index
    %102 = vector.load %arg2[%c7, %c0_23] : memref<98x256xf32, #tpu.memory_space<vmem>>, vector<1x256xf32>
    %c56 = arith.constant 56 : index
    %c0_24 = arith.constant 0 : index
    %103 = vector.load %arg2[%c56, %c0_24] : memref<98x256xf32, #tpu.memory_space<vmem>>, vector<1x256xf32>
    %104 = vector.extract_strided_slice %101 {offsets = [0, 0], sizes = [2, 256], strides = [1, 1]} : vector<4x256xf32> to vector<2x256xf32>
    %105 = vector.broadcast %102 : vector<1x256xf32> to vector<2x256xf32>
    %106 = arith.mulf %104, %105 : vector<2x256xf32>
    %107 = arith.addf %100, %106 : vector<2x256xf32>
    %108 = vector.extract_strided_slice %101 {offsets = [2, 0], sizes = [2, 256], strides = [1, 1]} : vector<4x256xf32> to vector<2x256xf32>
    %109 = vector.broadcast %103 : vector<1x256xf32> to vector<2x256xf32>
    %110 = arith.mulf %108, %109 : vector<2x256xf32>
    %111 = arith.addf %107, %110 : vector<2x256xf32>
    %c34_i32 = arith.constant 34 : i32
    %112 = tpu.dynamic_rotate %22 by %c34_i32 dim 1 : vector<4x256xf32>, i32 -> vector<4x256xf32>
    %c8 = arith.constant 8 : index
    %c0_25 = arith.constant 0 : index
    %113 = vector.load %arg2[%c8, %c0_25] : memref<98x256xf32, #tpu.memory_space<vmem>>, vector<1x256xf32>
    %c57 = arith.constant 57 : index
    %c0_26 = arith.constant 0 : index
    %114 = vector.load %arg2[%c57, %c0_26] : memref<98x256xf32, #tpu.memory_space<vmem>>, vector<1x256xf32>
    %115 = vector.extract_strided_slice %112 {offsets = [0, 0], sizes = [2, 256], strides = [1, 1]} : vector<4x256xf32> to vector<2x256xf32>
    %116 = vector.broadcast %113 : vector<1x256xf32> to vector<2x256xf32>
    %117 = arith.mulf %115, %116 : vector<2x256xf32>
    %118 = arith.addf %111, %117 : vector<2x256xf32>
    %119 = vector.extract_strided_slice %112 {offsets = [2, 0], sizes = [2, 256], strides = [1, 1]} : vector<4x256xf32> to vector<2x256xf32>
    %120 = vector.broadcast %114 : vector<1x256xf32> to vector<2x256xf32>
    %121 = arith.mulf %119, %120 : vector<2x256xf32>
    %122 = arith.addf %118, %121 : vector<2x256xf32>
    %c33_i32 = arith.constant 33 : i32
    %123 = tpu.dynamic_rotate %22 by %c33_i32 dim 1 : vector<4x256xf32>, i32 -> vector<4x256xf32>
    %c9 = arith.constant 9 : index
    %c0_27 = arith.constant 0 : index
    %124 = vector.load %arg2[%c9, %c0_27] : memref<98x256xf32, #tpu.memory_space<vmem>>, vector<1x256xf32>
    %c58 = arith.constant 58 : index
    %c0_28 = arith.constant 0 : index
    %125 = vector.load %arg2[%c58, %c0_28] : memref<98x256xf32, #tpu.memory_space<vmem>>, vector<1x256xf32>
    %126 = vector.extract_strided_slice %123 {offsets = [0, 0], sizes = [2, 256], strides = [1, 1]} : vector<4x256xf32> to vector<2x256xf32>
    %127 = vector.broadcast %124 : vector<1x256xf32> to vector<2x256xf32>
    %128 = arith.mulf %126, %127 : vector<2x256xf32>
    %129 = arith.addf %122, %128 : vector<2x256xf32>
    %130 = vector.extract_strided_slice %123 {offsets = [2, 0], sizes = [2, 256], strides = [1, 1]} : vector<4x256xf32> to vector<2x256xf32>
    %131 = vector.broadcast %125 : vector<1x256xf32> to vector<2x256xf32>
    %132 = arith.mulf %130, %131 : vector<2x256xf32>
    %133 = arith.addf %129, %132 : vector<2x256xf32>
    %c32_i32 = arith.constant 32 : i32
    %134 = tpu.dynamic_rotate %22 by %c32_i32 dim 1 : vector<4x256xf32>, i32 -> vector<4x256xf32>
    %c10 = arith.constant 10 : index
    %c0_29 = arith.constant 0 : index
    %135 = vector.load %arg2[%c10, %c0_29] : memref<98x256xf32, #tpu.memory_space<vmem>>, vector<1x256xf32>
    %c59 = arith.constant 59 : index
    %c0_30 = arith.constant 0 : index
    %136 = vector.load %arg2[%c59, %c0_30] : memref<98x256xf32, #tpu.memory_space<vmem>>, vector<1x256xf32>
    %137 = vector.extract_strided_slice %134 {offsets = [0, 0], sizes = [2, 256], strides = [1, 1]} : vector<4x256xf32> to vector<2x256xf32>
    %138 = vector.broadcast %135 : vector<1x256xf32> to vector<2x256xf32>
    %139 = arith.mulf %137, %138 : vector<2x256xf32>
    %140 = arith.addf %133, %139 : vector<2x256xf32>
    %141 = vector.extract_strided_slice %134 {offsets = [2, 0], sizes = [2, 256], strides = [1, 1]} : vector<4x256xf32> to vector<2x256xf32>
    %142 = vector.broadcast %136 : vector<1x256xf32> to vector<2x256xf32>
    %143 = arith.mulf %141, %142 : vector<2x256xf32>
    %144 = arith.addf %140, %143 : vector<2x256xf32>
    %c31_i32 = arith.constant 31 : i32
    %145 = tpu.dynamic_rotate %22 by %c31_i32 dim 1 : vector<4x256xf32>, i32 -> vector<4x256xf32>
    %c11 = arith.constant 11 : index
    %c0_31 = arith.constant 0 : index
    %146 = vector.load %arg2[%c11, %c0_31] : memref<98x256xf32, #tpu.memory_space<vmem>>, vector<1x256xf32>
    %c60 = arith.constant 60 : index
    %c0_32 = arith.constant 0 : index
    %147 = vector.load %arg2[%c60, %c0_32] : memref<98x256xf32, #tpu.memory_space<vmem>>, vector<1x256xf32>
    %148 = vector.extract_strided_slice %145 {offsets = [0, 0], sizes = [2, 256], strides = [1, 1]} : vector<4x256xf32> to vector<2x256xf32>
    %149 = vector.broadcast %146 : vector<1x256xf32> to vector<2x256xf32>
    %150 = arith.mulf %148, %149 : vector<2x256xf32>
    %151 = arith.addf %144, %150 : vector<2x256xf32>
    %152 = vector.extract_strided_slice %145 {offsets = [2, 0], sizes = [2, 256], strides = [1, 1]} : vector<4x256xf32> to vector<2x256xf32>
    %153 = vector.broadcast %147 : vector<1x256xf32> to vector<2x256xf32>
    %154 = arith.mulf %152, %153 : vector<2x256xf32>
    %155 = arith.addf %151, %154 : vector<2x256xf32>
    %c30_i32 = arith.constant 30 : i32
    %156 = tpu.dynamic_rotate %22 by %c30_i32 dim 1 : vector<4x256xf32>, i32 -> vector<4x256xf32>
    %c12 = arith.constant 12 : index
    %c0_33 = arith.constant 0 : index
    %157 = vector.load %arg2[%c12, %c0_33] : memref<98x256xf32, #tpu.memory_space<vmem>>, vector<1x256xf32>
    %c61 = arith.constant 61 : index
    %c0_34 = arith.constant 0 : index
    %158 = vector.load %arg2[%c61, %c0_34] : memref<98x256xf32, #tpu.memory_space<vmem>>, vector<1x256xf32>
    %159 = vector.extract_strided_slice %156 {offsets = [0, 0], sizes = [2, 256], strides = [1, 1]} : vector<4x256xf32> to vector<2x256xf32>
    %160 = vector.broadcast %157 : vector<1x256xf32> to vector<2x256xf32>
    %161 = arith.mulf %159, %160 : vector<2x256xf32>
    %162 = arith.addf %155, %161 : vector<2x256xf32>
    %163 = vector.extract_strided_slice %156 {offsets = [2, 0], sizes = [2, 256], strides = [1, 1]} : vector<4x256xf32> to vector<2x256xf32>
    %164 = vector.broadcast %158 : vector<1x256xf32> to vector<2x256xf32>
    %165 = arith.mulf %163, %164 : vector<2x256xf32>
    %166 = arith.addf %162, %165 : vector<2x256xf32>
    %c29_i32 = arith.constant 29 : i32
    %167 = tpu.dynamic_rotate %22 by %c29_i32 dim 1 : vector<4x256xf32>, i32 -> vector<4x256xf32>
    %c13 = arith.constant 13 : index
    %c0_35 = arith.constant 0 : index
    %168 = vector.load %arg2[%c13, %c0_35] : memref<98x256xf32, #tpu.memory_space<vmem>>, vector<1x256xf32>
    %c62 = arith.constant 62 : index
    %c0_36 = arith.constant 0 : index
    %169 = vector.load %arg2[%c62, %c0_36] : memref<98x256xf32, #tpu.memory_space<vmem>>, vector<1x256xf32>
    %170 = vector.extract_strided_slice %167 {offsets = [0, 0], sizes = [2, 256], strides = [1, 1]} : vector<4x256xf32> to vector<2x256xf32>
    %171 = vector.broadcast %168 : vector<1x256xf32> to vector<2x256xf32>
    %172 = arith.mulf %170, %171 : vector<2x256xf32>
    %173 = arith.addf %166, %172 : vector<2x256xf32>
    %174 = vector.extract_strided_slice %167 {offsets = [2, 0], sizes = [2, 256], strides = [1, 1]} : vector<4x256xf32> to vector<2x256xf32>
    %175 = vector.broadcast %169 : vector<1x256xf32> to vector<2x256xf32>
    %176 = arith.mulf %174, %175 : vector<2x256xf32>
    %177 = arith.addf %173, %176 : vector<2x256xf32>
    %c19_i32 = arith.constant 19 : i32
    %178 = tpu.dynamic_rotate %22 by %c19_i32 dim 1 : vector<4x256xf32>, i32 -> vector<4x256xf32>
    %c14 = arith.constant 14 : index
    %c0_37 = arith.constant 0 : index
    %179 = vector.load %arg2[%c14, %c0_37] : memref<98x256xf32, #tpu.memory_space<vmem>>, vector<1x256xf32>
    %c63 = arith.constant 63 : index
    %c0_38 = arith.constant 0 : index
    %180 = vector.load %arg2[%c63, %c0_38] : memref<98x256xf32, #tpu.memory_space<vmem>>, vector<1x256xf32>
    %181 = vector.extract_strided_slice %178 {offsets = [0, 0], sizes = [2, 256], strides = [1, 1]} : vector<4x256xf32> to vector<2x256xf32>
    %182 = vector.broadcast %179 : vector<1x256xf32> to vector<2x256xf32>
    %183 = arith.mulf %181, %182 : vector<2x256xf32>
    %184 = arith.addf %177, %183 : vector<2x256xf32>
    %185 = vector.extract_strided_slice %178 {offsets = [2, 0], sizes = [2, 256], strides = [1, 1]} : vector<4x256xf32> to vector<2x256xf32>
    %186 = vector.broadcast %180 : vector<1x256xf32> to vector<2x256xf32>
    %187 = arith.mulf %185, %186 : vector<2x256xf32>
    %188 = arith.addf %184, %187 : vector<2x256xf32>
    %c18_i32 = arith.constant 18 : i32
    %189 = tpu.dynamic_rotate %22 by %c18_i32 dim 1 : vector<4x256xf32>, i32 -> vector<4x256xf32>
    %c15 = arith.constant 15 : index
    %c0_39 = arith.constant 0 : index
    %190 = vector.load %arg2[%c15, %c0_39] : memref<98x256xf32, #tpu.memory_space<vmem>>, vector<1x256xf32>
    %c64 = arith.constant 64 : index
    %c0_40 = arith.constant 0 : index
    %191 = vector.load %arg2[%c64, %c0_40] : memref<98x256xf32, #tpu.memory_space<vmem>>, vector<1x256xf32>
    %192 = vector.extract_strided_slice %189 {offsets = [0, 0], sizes = [2, 256], strides = [1, 1]} : vector<4x256xf32> to vector<2x256xf32>
    %193 = vector.broadcast %190 : vector<1x256xf32> to vector<2x256xf32>
    %194 = arith.mulf %192, %193 : vector<2x256xf32>
    %195 = arith.addf %188, %194 : vector<2x256xf32>
    %196 = vector.extract_strided_slice %189 {offsets = [2, 0], sizes = [2, 256], strides = [1, 1]} : vector<4x256xf32> to vector<2x256xf32>
    %197 = vector.broadcast %191 : vector<1x256xf32> to vector<2x256xf32>
    %198 = arith.mulf %196, %197 : vector<2x256xf32>
    %199 = arith.addf %195, %198 : vector<2x256xf32>
    %c17_i32 = arith.constant 17 : i32
    %200 = tpu.dynamic_rotate %22 by %c17_i32 dim 1 : vector<4x256xf32>, i32 -> vector<4x256xf32>
    %c16 = arith.constant 16 : index
    %c0_41 = arith.constant 0 : index
    %201 = vector.load %arg2[%c16, %c0_41] : memref<98x256xf32, #tpu.memory_space<vmem>>, vector<1x256xf32>
    %c65 = arith.constant 65 : index
    %c0_42 = arith.constant 0 : index
    %202 = vector.load %arg2[%c65, %c0_42] : memref<98x256xf32, #tpu.memory_space<vmem>>, vector<1x256xf32>
    %203 = vector.extract_strided_slice %200 {offsets = [0, 0], sizes = [2, 256], strides = [1, 1]} : vector<4x256xf32> to vector<2x256xf32>
    %204 = vector.broadcast %201 : vector<1x256xf32> to vector<2x256xf32>
    %205 = arith.mulf %203, %204 : vector<2x256xf32>
    %206 = arith.addf %199, %205 : vector<2x256xf32>
    %207 = vector.extract_strided_slice %200 {offsets = [2, 0], sizes = [2, 256], strides = [1, 1]} : vector<4x256xf32> to vector<2x256xf32>
    %208 = vector.broadcast %202 : vector<1x256xf32> to vector<2x256xf32>
    %209 = arith.mulf %207, %208 : vector<2x256xf32>
    %210 = arith.addf %206, %209 : vector<2x256xf32>
    %c16_i32 = arith.constant 16 : i32
    %211 = tpu.dynamic_rotate %22 by %c16_i32 dim 1 : vector<4x256xf32>, i32 -> vector<4x256xf32>
    %c17 = arith.constant 17 : index
    %c0_43 = arith.constant 0 : index
    %212 = vector.load %arg2[%c17, %c0_43] : memref<98x256xf32, #tpu.memory_space<vmem>>, vector<1x256xf32>
    %c66 = arith.constant 66 : index
    %c0_44 = arith.constant 0 : index
    %213 = vector.load %arg2[%c66, %c0_44] : memref<98x256xf32, #tpu.memory_space<vmem>>, vector<1x256xf32>
    %214 = vector.extract_strided_slice %211 {offsets = [0, 0], sizes = [2, 256], strides = [1, 1]} : vector<4x256xf32> to vector<2x256xf32>
    %215 = vector.broadcast %212 : vector<1x256xf32> to vector<2x256xf32>
    %216 = arith.mulf %214, %215 : vector<2x256xf32>
    %217 = arith.addf %210, %216 : vector<2x256xf32>
    %218 = vector.extract_strided_slice %211 {offsets = [2, 0], sizes = [2, 256], strides = [1, 1]} : vector<4x256xf32> to vector<2x256xf32>
    %219 = vector.broadcast %213 : vector<1x256xf32> to vector<2x256xf32>
    %220 = arith.mulf %218, %219 : vector<2x256xf32>
    %221 = arith.addf %217, %220 : vector<2x256xf32>
    %c15_i32 = arith.constant 15 : i32
    %222 = tpu.dynamic_rotate %22 by %c15_i32 dim 1 : vector<4x256xf32>, i32 -> vector<4x256xf32>
    %c18 = arith.constant 18 : index
    %c0_45 = arith.constant 0 : index
    %223 = vector.load %arg2[%c18, %c0_45] : memref<98x256xf32, #tpu.memory_space<vmem>>, vector<1x256xf32>
    %c67 = arith.constant 67 : index
    %c0_46 = arith.constant 0 : index
    %224 = vector.load %arg2[%c67, %c0_46] : memref<98x256xf32, #tpu.memory_space<vmem>>, vector<1x256xf32>
    %225 = vector.extract_strided_slice %222 {offsets = [0, 0], sizes = [2, 256], strides = [1, 1]} : vector<4x256xf32> to vector<2x256xf32>
    %226 = vector.broadcast %223 : vector<1x256xf32> to vector<2x256xf32>
    %227 = arith.mulf %225, %226 : vector<2x256xf32>
    %228 = arith.addf %221, %227 : vector<2x256xf32>
    %229 = vector.extract_strided_slice %222 {offsets = [2, 0], sizes = [2, 256], strides = [1, 1]} : vector<4x256xf32> to vector<2x256xf32>
    %230 = vector.broadcast %224 : vector<1x256xf32> to vector<2x256xf32>
    %231 = arith.mulf %229, %230 : vector<2x256xf32>
    %232 = arith.addf %228, %231 : vector<2x256xf32>
    %c14_i32 = arith.constant 14 : i32
    %233 = tpu.dynamic_rotate %22 by %c14_i32 dim 1 : vector<4x256xf32>, i32 -> vector<4x256xf32>
    %c19 = arith.constant 19 : index
    %c0_47 = arith.constant 0 : index
    %234 = vector.load %arg2[%c19, %c0_47] : memref<98x256xf32, #tpu.memory_space<vmem>>, vector<1x256xf32>
    %c68 = arith.constant 68 : index
    %c0_48 = arith.constant 0 : index
    %235 = vector.load %arg2[%c68, %c0_48] : memref<98x256xf32, #tpu.memory_space<vmem>>, vector<1x256xf32>
    %236 = vector.extract_strided_slice %233 {offsets = [0, 0], sizes = [2, 256], strides = [1, 1]} : vector<4x256xf32> to vector<2x256xf32>
    %237 = vector.broadcast %234 : vector<1x256xf32> to vector<2x256xf32>
    %238 = arith.mulf %236, %237 : vector<2x256xf32>
    %239 = arith.addf %232, %238 : vector<2x256xf32>
    %240 = vector.extract_strided_slice %233 {offsets = [2, 0], sizes = [2, 256], strides = [1, 1]} : vector<4x256xf32> to vector<2x256xf32>
    %241 = vector.broadcast %235 : vector<1x256xf32> to vector<2x256xf32>
    %242 = arith.mulf %240, %241 : vector<2x256xf32>
    %243 = arith.addf %239, %242 : vector<2x256xf32>
    %c13_i32 = arith.constant 13 : i32
    %244 = tpu.dynamic_rotate %22 by %c13_i32 dim 1 : vector<4x256xf32>, i32 -> vector<4x256xf32>
    %c20 = arith.constant 20 : index
    %c0_49 = arith.constant 0 : index
    %245 = vector.load %arg2[%c20, %c0_49] : memref<98x256xf32, #tpu.memory_space<vmem>>, vector<1x256xf32>
    %c69 = arith.constant 69 : index
    %c0_50 = arith.constant 0 : index
    %246 = vector.load %arg2[%c69, %c0_50] : memref<98x256xf32, #tpu.memory_space<vmem>>, vector<1x256xf32>
    %247 = vector.extract_strided_slice %244 {offsets = [0, 0], sizes = [2, 256], strides = [1, 1]} : vector<4x256xf32> to vector<2x256xf32>
    %248 = vector.broadcast %245 : vector<1x256xf32> to vector<2x256xf32>
    %249 = arith.mulf %247, %248 : vector<2x256xf32>
    %250 = arith.addf %243, %249 : vector<2x256xf32>
    %251 = vector.extract_strided_slice %244 {offsets = [2, 0], sizes = [2, 256], strides = [1, 1]} : vector<4x256xf32> to vector<2x256xf32>
    %252 = vector.broadcast %246 : vector<1x256xf32> to vector<2x256xf32>
    %253 = arith.mulf %251, %252 : vector<2x256xf32>
    %254 = arith.addf %250, %253 : vector<2x256xf32>
    %c3_i32 = arith.constant 3 : i32
    %255 = tpu.dynamic_rotate %22 by %c3_i32 dim 1 : vector<4x256xf32>, i32 -> vector<4x256xf32>
    %c21 = arith.constant 21 : index
    %c0_51 = arith.constant 0 : index
    %256 = vector.load %arg2[%c21, %c0_51] : memref<98x256xf32, #tpu.memory_space<vmem>>, vector<1x256xf32>
    %c70 = arith.constant 70 : index
    %c0_52 = arith.constant 0 : index
    %257 = vector.load %arg2[%c70, %c0_52] : memref<98x256xf32, #tpu.memory_space<vmem>>, vector<1x256xf32>
    %258 = vector.extract_strided_slice %255 {offsets = [0, 0], sizes = [2, 256], strides = [1, 1]} : vector<4x256xf32> to vector<2x256xf32>
    %259 = vector.broadcast %256 : vector<1x256xf32> to vector<2x256xf32>
    %260 = arith.mulf %258, %259 : vector<2x256xf32>
    %261 = arith.addf %254, %260 : vector<2x256xf32>
    %262 = vector.extract_strided_slice %255 {offsets = [2, 0], sizes = [2, 256], strides = [1, 1]} : vector<4x256xf32> to vector<2x256xf32>
    %263 = vector.broadcast %257 : vector<1x256xf32> to vector<2x256xf32>
    %264 = arith.mulf %262, %263 : vector<2x256xf32>
    %265 = arith.addf %261, %264 : vector<2x256xf32>
    %c2_i32_53 = arith.constant 2 : i32
    %266 = tpu.dynamic_rotate %22 by %c2_i32_53 dim 1 : vector<4x256xf32>, i32 -> vector<4x256xf32>
    %c22 = arith.constant 22 : index
    %c0_54 = arith.constant 0 : index
    %267 = vector.load %arg2[%c22, %c0_54] : memref<98x256xf32, #tpu.memory_space<vmem>>, vector<1x256xf32>
    %c71 = arith.constant 71 : index
    %c0_55 = arith.constant 0 : index
    %268 = vector.load %arg2[%c71, %c0_55] : memref<98x256xf32, #tpu.memory_space<vmem>>, vector<1x256xf32>
    %269 = vector.extract_strided_slice %266 {offsets = [0, 0], sizes = [2, 256], strides = [1, 1]} : vector<4x256xf32> to vector<2x256xf32>
    %270 = vector.broadcast %267 : vector<1x256xf32> to vector<2x256xf32>
    %271 = arith.mulf %269, %270 : vector<2x256xf32>
    %272 = arith.addf %265, %271 : vector<2x256xf32>
    %273 = vector.extract_strided_slice %266 {offsets = [2, 0], sizes = [2, 256], strides = [1, 1]} : vector<4x256xf32> to vector<2x256xf32>
    %274 = vector.broadcast %268 : vector<1x256xf32> to vector<2x256xf32>
    %275 = arith.mulf %273, %274 : vector<2x256xf32>
    %276 = arith.addf %272, %275 : vector<2x256xf32>
    %c1_i32_56 = arith.constant 1 : i32
    %277 = tpu.dynamic_rotate %22 by %c1_i32_56 dim 1 : vector<4x256xf32>, i32 -> vector<4x256xf32>
    %c23 = arith.constant 23 : index
    %c0_57 = arith.constant 0 : index
    %278 = vector.load %arg2[%c23, %c0_57] : memref<98x256xf32, #tpu.memory_space<vmem>>, vector<1x256xf32>
    %c72 = arith.constant 72 : index
    %c0_58 = arith.constant 0 : index
    %279 = vector.load %arg2[%c72, %c0_58] : memref<98x256xf32, #tpu.memory_space<vmem>>, vector<1x256xf32>
    %280 = vector.extract_strided_slice %277 {offsets = [0, 0], sizes = [2, 256], strides = [1, 1]} : vector<4x256xf32> to vector<2x256xf32>
    %281 = vector.broadcast %278 : vector<1x256xf32> to vector<2x256xf32>
    %282 = arith.mulf %280, %281 : vector<2x256xf32>
    %283 = arith.addf %276, %282 : vector<2x256xf32>
    %284 = vector.extract_strided_slice %277 {offsets = [2, 0], sizes = [2, 256], strides = [1, 1]} : vector<4x256xf32> to vector<2x256xf32>
    %285 = vector.broadcast %279 : vector<1x256xf32> to vector<2x256xf32>
    %286 = arith.mulf %284, %285 : vector<2x256xf32>
    %287 = arith.addf %283, %286 : vector<2x256xf32>
    %c24 = arith.constant 24 : index
    %c0_59 = arith.constant 0 : index
    %288 = vector.load %arg2[%c24, %c0_59] : memref<98x256xf32, #tpu.memory_space<vmem>>, vector<1x256xf32>
    %c73 = arith.constant 73 : index
    %c0_60 = arith.constant 0 : index
    %289 = vector.load %arg2[%c73, %c0_60] : memref<98x256xf32, #tpu.memory_space<vmem>>, vector<1x256xf32>
    %290 = vector.extract_strided_slice %22 {offsets = [0, 0], sizes = [2, 256], strides = [1, 1]} : vector<4x256xf32> to vector<2x256xf32>
    %291 = vector.broadcast %288 : vector<1x256xf32> to vector<2x256xf32>
    %292 = arith.mulf %290, %291 : vector<2x256xf32>
    %293 = arith.addf %287, %292 : vector<2x256xf32>
    %294 = vector.extract_strided_slice %22 {offsets = [2, 0], sizes = [2, 256], strides = [1, 1]} : vector<4x256xf32> to vector<2x256xf32>
    %295 = vector.broadcast %289 : vector<1x256xf32> to vector<2x256xf32>
    %296 = arith.mulf %294, %295 : vector<2x256xf32>
    %297 = arith.addf %293, %296 : vector<2x256xf32>
    %c255_i32 = arith.constant 255 : i32
    %298 = tpu.dynamic_rotate %22 by %c255_i32 dim 1 : vector<4x256xf32>, i32 -> vector<4x256xf32>
    %c25 = arith.constant 25 : index
    %c0_61 = arith.constant 0 : index
    %299 = vector.load %arg2[%c25, %c0_61] : memref<98x256xf32, #tpu.memory_space<vmem>>, vector<1x256xf32>
    %c74 = arith.constant 74 : index
    %c0_62 = arith.constant 0 : index
    %300 = vector.load %arg2[%c74, %c0_62] : memref<98x256xf32, #tpu.memory_space<vmem>>, vector<1x256xf32>
    %301 = vector.extract_strided_slice %298 {offsets = [0, 0], sizes = [2, 256], strides = [1, 1]} : vector<4x256xf32> to vector<2x256xf32>
    %302 = vector.broadcast %299 : vector<1x256xf32> to vector<2x256xf32>
    %303 = arith.mulf %301, %302 : vector<2x256xf32>
    %304 = arith.addf %297, %303 : vector<2x256xf32>
    %305 = vector.extract_strided_slice %298 {offsets = [2, 0], sizes = [2, 256], strides = [1, 1]} : vector<4x256xf32> to vector<2x256xf32>
    %306 = vector.broadcast %300 : vector<1x256xf32> to vector<2x256xf32>
    %307 = arith.mulf %305, %306 : vector<2x256xf32>
    %308 = arith.addf %304, %307 : vector<2x256xf32>
    %c254_i32 = arith.constant 254 : i32
    %309 = tpu.dynamic_rotate %22 by %c254_i32 dim 1 : vector<4x256xf32>, i32 -> vector<4x256xf32>
    %c26 = arith.constant 26 : index
    %c0_63 = arith.constant 0 : index
    %310 = vector.load %arg2[%c26, %c0_63] : memref<98x256xf32, #tpu.memory_space<vmem>>, vector<1x256xf32>
    %c75 = arith.constant 75 : index
    %c0_64 = arith.constant 0 : index
    %311 = vector.load %arg2[%c75, %c0_64] : memref<98x256xf32, #tpu.memory_space<vmem>>, vector<1x256xf32>
    %312 = vector.extract_strided_slice %309 {offsets = [0, 0], sizes = [2, 256], strides = [1, 1]} : vector<4x256xf32> to vector<2x256xf32>
    %313 = vector.broadcast %310 : vector<1x256xf32> to vector<2x256xf32>
    %314 = arith.mulf %312, %313 : vector<2x256xf32>
    %315 = arith.addf %308, %314 : vector<2x256xf32>
    %316 = vector.extract_strided_slice %309 {offsets = [2, 0], sizes = [2, 256], strides = [1, 1]} : vector<4x256xf32> to vector<2x256xf32>
    %317 = vector.broadcast %311 : vector<1x256xf32> to vector<2x256xf32>
    %318 = arith.mulf %316, %317 : vector<2x256xf32>
    %319 = arith.addf %315, %318 : vector<2x256xf32>
    %c253_i32 = arith.constant 253 : i32
    %320 = tpu.dynamic_rotate %22 by %c253_i32 dim 1 : vector<4x256xf32>, i32 -> vector<4x256xf32>
    %c27 = arith.constant 27 : index
    %c0_65 = arith.constant 0 : index
    %321 = vector.load %arg2[%c27, %c0_65] : memref<98x256xf32, #tpu.memory_space<vmem>>, vector<1x256xf32>
    %c76 = arith.constant 76 : index
    %c0_66 = arith.constant 0 : index
    %322 = vector.load %arg2[%c76, %c0_66] : memref<98x256xf32, #tpu.memory_space<vmem>>, vector<1x256xf32>
    %323 = vector.extract_strided_slice %320 {offsets = [0, 0], sizes = [2, 256], strides = [1, 1]} : vector<4x256xf32> to vector<2x256xf32>
    %324 = vector.broadcast %321 : vector<1x256xf32> to vector<2x256xf32>
    %325 = arith.mulf %323, %324 : vector<2x256xf32>
    %326 = arith.addf %319, %325 : vector<2x256xf32>
    %327 = vector.extract_strided_slice %320 {offsets = [2, 0], sizes = [2, 256], strides = [1, 1]} : vector<4x256xf32> to vector<2x256xf32>
    %328 = vector.broadcast %322 : vector<1x256xf32> to vector<2x256xf32>
    %329 = arith.mulf %327, %328 : vector<2x256xf32>
    %330 = arith.addf %326, %329 : vector<2x256xf32>
    %c243_i32 = arith.constant 243 : i32
    %331 = tpu.dynamic_rotate %22 by %c243_i32 dim 1 : vector<4x256xf32>, i32 -> vector<4x256xf32>
    %c28 = arith.constant 28 : index
    %c0_67 = arith.constant 0 : index
    %332 = vector.load %arg2[%c28, %c0_67] : memref<98x256xf32, #tpu.memory_space<vmem>>, vector<1x256xf32>
    %c77 = arith.constant 77 : index
    %c0_68 = arith.constant 0 : index
    %333 = vector.load %arg2[%c77, %c0_68] : memref<98x256xf32, #tpu.memory_space<vmem>>, vector<1x256xf32>
    %334 = vector.extract_strided_slice %331 {offsets = [0, 0], sizes = [2, 256], strides = [1, 1]} : vector<4x256xf32> to vector<2x256xf32>
    %335 = vector.broadcast %332 : vector<1x256xf32> to vector<2x256xf32>
    %336 = arith.mulf %334, %335 : vector<2x256xf32>
    %337 = arith.addf %330, %336 : vector<2x256xf32>
    %338 = vector.extract_strided_slice %331 {offsets = [2, 0], sizes = [2, 256], strides = [1, 1]} : vector<4x256xf32> to vector<2x256xf32>
    %339 = vector.broadcast %333 : vector<1x256xf32> to vector<2x256xf32>
    %340 = arith.mulf %338, %339 : vector<2x256xf32>
    %341 = arith.addf %337, %340 : vector<2x256xf32>
    %c242_i32 = arith.constant 242 : i32
    %342 = tpu.dynamic_rotate %22 by %c242_i32 dim 1 : vector<4x256xf32>, i32 -> vector<4x256xf32>
    %c29 = arith.constant 29 : index
    %c0_69 = arith.constant 0 : index
    %343 = vector.load %arg2[%c29, %c0_69] : memref<98x256xf32, #tpu.memory_space<vmem>>, vector<1x256xf32>
    %c78 = arith.constant 78 : index
    %c0_70 = arith.constant 0 : index
    %344 = vector.load %arg2[%c78, %c0_70] : memref<98x256xf32, #tpu.memory_space<vmem>>, vector<1x256xf32>
    %345 = vector.extract_strided_slice %342 {offsets = [0, 0], sizes = [2, 256], strides = [1, 1]} : vector<4x256xf32> to vector<2x256xf32>
    %346 = vector.broadcast %343 : vector<1x256xf32> to vector<2x256xf32>
    %347 = arith.mulf %345, %346 : vector<2x256xf32>
    %348 = arith.addf %341, %347 : vector<2x256xf32>
    %349 = vector.extract_strided_slice %342 {offsets = [2, 0], sizes = [2, 256], strides = [1, 1]} : vector<4x256xf32> to vector<2x256xf32>
    %350 = vector.broadcast %344 : vector<1x256xf32> to vector<2x256xf32>
    %351 = arith.mulf %349, %350 : vector<2x256xf32>
    %352 = arith.addf %348, %351 : vector<2x256xf32>
    %c241_i32 = arith.constant 241 : i32
    %353 = tpu.dynamic_rotate %22 by %c241_i32 dim 1 : vector<4x256xf32>, i32 -> vector<4x256xf32>
    %c30 = arith.constant 30 : index
    %c0_71 = arith.constant 0 : index
    %354 = vector.load %arg2[%c30, %c0_71] : memref<98x256xf32, #tpu.memory_space<vmem>>, vector<1x256xf32>
    %c79 = arith.constant 79 : index
    %c0_72 = arith.constant 0 : index
    %355 = vector.load %arg2[%c79, %c0_72] : memref<98x256xf32, #tpu.memory_space<vmem>>, vector<1x256xf32>
    %356 = vector.extract_strided_slice %353 {offsets = [0, 0], sizes = [2, 256], strides = [1, 1]} : vector<4x256xf32> to vector<2x256xf32>
    %357 = vector.broadcast %354 : vector<1x256xf32> to vector<2x256xf32>
    %358 = arith.mulf %356, %357 : vector<2x256xf32>
    %359 = arith.addf %352, %358 : vector<2x256xf32>
    %360 = vector.extract_strided_slice %353 {offsets = [2, 0], sizes = [2, 256], strides = [1, 1]} : vector<4x256xf32> to vector<2x256xf32>
    %361 = vector.broadcast %355 : vector<1x256xf32> to vector<2x256xf32>
    %362 = arith.mulf %360, %361 : vector<2x256xf32>
    %363 = arith.addf %359, %362 : vector<2x256xf32>
    %c240_i32 = arith.constant 240 : i32
    %364 = tpu.dynamic_rotate %22 by %c240_i32 dim 1 : vector<4x256xf32>, i32 -> vector<4x256xf32>
    %c31 = arith.constant 31 : index
    %c0_73 = arith.constant 0 : index
    %365 = vector.load %arg2[%c31, %c0_73] : memref<98x256xf32, #tpu.memory_space<vmem>>, vector<1x256xf32>
    %c80 = arith.constant 80 : index
    %c0_74 = arith.constant 0 : index
    %366 = vector.load %arg2[%c80, %c0_74] : memref<98x256xf32, #tpu.memory_space<vmem>>, vector<1x256xf32>
    %367 = vector.extract_strided_slice %364 {offsets = [0, 0], sizes = [2, 256], strides = [1, 1]} : vector<4x256xf32> to vector<2x256xf32>
    %368 = vector.broadcast %365 : vector<1x256xf32> to vector<2x256xf32>
    %369 = arith.mulf %367, %368 : vector<2x256xf32>
    %370 = arith.addf %363, %369 : vector<2x256xf32>
    %371 = vector.extract_strided_slice %364 {offsets = [2, 0], sizes = [2, 256], strides = [1, 1]} : vector<4x256xf32> to vector<2x256xf32>
    %372 = vector.broadcast %366 : vector<1x256xf32> to vector<2x256xf32>
    %373 = arith.mulf %371, %372 : vector<2x256xf32>
    %374 = arith.addf %370, %373 : vector<2x256xf32>
    %c239_i32 = arith.constant 239 : i32
    %375 = tpu.dynamic_rotate %22 by %c239_i32 dim 1 : vector<4x256xf32>, i32 -> vector<4x256xf32>
    %c32 = arith.constant 32 : index
    %c0_75 = arith.constant 0 : index
    %376 = vector.load %arg2[%c32, %c0_75] : memref<98x256xf32, #tpu.memory_space<vmem>>, vector<1x256xf32>
    %c81 = arith.constant 81 : index
    %c0_76 = arith.constant 0 : index
    %377 = vector.load %arg2[%c81, %c0_76] : memref<98x256xf32, #tpu.memory_space<vmem>>, vector<1x256xf32>
    %378 = vector.extract_strided_slice %375 {offsets = [0, 0], sizes = [2, 256], strides = [1, 1]} : vector<4x256xf32> to vector<2x256xf32>
    %379 = vector.broadcast %376 : vector<1x256xf32> to vector<2x256xf32>
    %380 = arith.mulf %378, %379 : vector<2x256xf32>
    %381 = arith.addf %374, %380 : vector<2x256xf32>
    %382 = vector.extract_strided_slice %375 {offsets = [2, 0], sizes = [2, 256], strides = [1, 1]} : vector<4x256xf32> to vector<2x256xf32>
    %383 = vector.broadcast %377 : vector<1x256xf32> to vector<2x256xf32>
    %384 = arith.mulf %382, %383 : vector<2x256xf32>
    %385 = arith.addf %381, %384 : vector<2x256xf32>
    %c238_i32 = arith.constant 238 : i32
    %386 = tpu.dynamic_rotate %22 by %c238_i32 dim 1 : vector<4x256xf32>, i32 -> vector<4x256xf32>
    %c33 = arith.constant 33 : index
    %c0_77 = arith.constant 0 : index
    %387 = vector.load %arg2[%c33, %c0_77] : memref<98x256xf32, #tpu.memory_space<vmem>>, vector<1x256xf32>
    %c82 = arith.constant 82 : index
    %c0_78 = arith.constant 0 : index
    %388 = vector.load %arg2[%c82, %c0_78] : memref<98x256xf32, #tpu.memory_space<vmem>>, vector<1x256xf32>
    %389 = vector.extract_strided_slice %386 {offsets = [0, 0], sizes = [2, 256], strides = [1, 1]} : vector<4x256xf32> to vector<2x256xf32>
    %390 = vector.broadcast %387 : vector<1x256xf32> to vector<2x256xf32>
    %391 = arith.mulf %389, %390 : vector<2x256xf32>
    %392 = arith.addf %385, %391 : vector<2x256xf32>
    %393 = vector.extract_strided_slice %386 {offsets = [2, 0], sizes = [2, 256], strides = [1, 1]} : vector<4x256xf32> to vector<2x256xf32>
    %394 = vector.broadcast %388 : vector<1x256xf32> to vector<2x256xf32>
    %395 = arith.mulf %393, %394 : vector<2x256xf32>
    %396 = arith.addf %392, %395 : vector<2x256xf32>
    %c237_i32 = arith.constant 237 : i32
    %397 = tpu.dynamic_rotate %22 by %c237_i32 dim 1 : vector<4x256xf32>, i32 -> vector<4x256xf32>
    %c34 = arith.constant 34 : index
    %c0_79 = arith.constant 0 : index
    %398 = vector.load %arg2[%c34, %c0_79] : memref<98x256xf32, #tpu.memory_space<vmem>>, vector<1x256xf32>
    %c83 = arith.constant 83 : index
    %c0_80 = arith.constant 0 : index
    %399 = vector.load %arg2[%c83, %c0_80] : memref<98x256xf32, #tpu.memory_space<vmem>>, vector<1x256xf32>
    %400 = vector.extract_strided_slice %397 {offsets = [0, 0], sizes = [2, 256], strides = [1, 1]} : vector<4x256xf32> to vector<2x256xf32>
    %401 = vector.broadcast %398 : vector<1x256xf32> to vector<2x256xf32>
    %402 = arith.mulf %400, %401 : vector<2x256xf32>
    %403 = arith.addf %396, %402 : vector<2x256xf32>
    %404 = vector.extract_strided_slice %397 {offsets = [2, 0], sizes = [2, 256], strides = [1, 1]} : vector<4x256xf32> to vector<2x256xf32>
    %405 = vector.broadcast %399 : vector<1x256xf32> to vector<2x256xf32>
    %406 = arith.mulf %404, %405 : vector<2x256xf32>
    %407 = arith.addf %403, %406 : vector<2x256xf32>
    %c227_i32 = arith.constant 227 : i32
    %408 = tpu.dynamic_rotate %22 by %c227_i32 dim 1 : vector<4x256xf32>, i32 -> vector<4x256xf32>
    %c35 = arith.constant 35 : index
    %c0_81 = arith.constant 0 : index
    %409 = vector.load %arg2[%c35, %c0_81] : memref<98x256xf32, #tpu.memory_space<vmem>>, vector<1x256xf32>
    %c84 = arith.constant 84 : index
    %c0_82 = arith.constant 0 : index
    %410 = vector.load %arg2[%c84, %c0_82] : memref<98x256xf32, #tpu.memory_space<vmem>>, vector<1x256xf32>
    %411 = vector.extract_strided_slice %408 {offsets = [0, 0], sizes = [2, 256], strides = [1, 1]} : vector<4x256xf32> to vector<2x256xf32>
    %412 = vector.broadcast %409 : vector<1x256xf32> to vector<2x256xf32>
    %413 = arith.mulf %411, %412 : vector<2x256xf32>
    %414 = arith.addf %407, %413 : vector<2x256xf32>
    %415 = vector.extract_strided_slice %408 {offsets = [2, 0], sizes = [2, 256], strides = [1, 1]} : vector<4x256xf32> to vector<2x256xf32>
    %416 = vector.broadcast %410 : vector<1x256xf32> to vector<2x256xf32>
    %417 = arith.mulf %415, %416 : vector<2x256xf32>
    %418 = arith.addf %414, %417 : vector<2x256xf32>
    %c226_i32 = arith.constant 226 : i32
    %419 = tpu.dynamic_rotate %22 by %c226_i32 dim 1 : vector<4x256xf32>, i32 -> vector<4x256xf32>
    %c36 = arith.constant 36 : index
    %c0_83 = arith.constant 0 : index
    %420 = vector.load %arg2[%c36, %c0_83] : memref<98x256xf32, #tpu.memory_space<vmem>>, vector<1x256xf32>
    %c85 = arith.constant 85 : index
    %c0_84 = arith.constant 0 : index
    %421 = vector.load %arg2[%c85, %c0_84] : memref<98x256xf32, #tpu.memory_space<vmem>>, vector<1x256xf32>
    %422 = vector.extract_strided_slice %419 {offsets = [0, 0], sizes = [2, 256], strides = [1, 1]} : vector<4x256xf32> to vector<2x256xf32>
    %423 = vector.broadcast %420 : vector<1x256xf32> to vector<2x256xf32>
    %424 = arith.mulf %422, %423 : vector<2x256xf32>
    %425 = arith.addf %418, %424 : vector<2x256xf32>
    %426 = vector.extract_strided_slice %419 {offsets = [2, 0], sizes = [2, 256], strides = [1, 1]} : vector<4x256xf32> to vector<2x256xf32>
    %427 = vector.broadcast %421 : vector<1x256xf32> to vector<2x256xf32>
    %428 = arith.mulf %426, %427 : vector<2x256xf32>
    %429 = arith.addf %425, %428 : vector<2x256xf32>
    %c225_i32 = arith.constant 225 : i32
    %430 = tpu.dynamic_rotate %22 by %c225_i32 dim 1 : vector<4x256xf32>, i32 -> vector<4x256xf32>
    %c37 = arith.constant 37 : index
    %c0_85 = arith.constant 0 : index
    %431 = vector.load %arg2[%c37, %c0_85] : memref<98x256xf32, #tpu.memory_space<vmem>>, vector<1x256xf32>
    %c86 = arith.constant 86 : index
    %c0_86 = arith.constant 0 : index
    %432 = vector.load %arg2[%c86, %c0_86] : memref<98x256xf32, #tpu.memory_space<vmem>>, vector<1x256xf32>
    %433 = vector.extract_strided_slice %430 {offsets = [0, 0], sizes = [2, 256], strides = [1, 1]} : vector<4x256xf32> to vector<2x256xf32>
    %434 = vector.broadcast %431 : vector<1x256xf32> to vector<2x256xf32>
    %435 = arith.mulf %433, %434 : vector<2x256xf32>
    %436 = arith.addf %429, %435 : vector<2x256xf32>
    %437 = vector.extract_strided_slice %430 {offsets = [2, 0], sizes = [2, 256], strides = [1, 1]} : vector<4x256xf32> to vector<2x256xf32>
    %438 = vector.broadcast %432 : vector<1x256xf32> to vector<2x256xf32>
    %439 = arith.mulf %437, %438 : vector<2x256xf32>
    %440 = arith.addf %436, %439 : vector<2x256xf32>
    %c224_i32 = arith.constant 224 : i32
    %441 = tpu.dynamic_rotate %22 by %c224_i32 dim 1 : vector<4x256xf32>, i32 -> vector<4x256xf32>
    %c38 = arith.constant 38 : index
    %c0_87 = arith.constant 0 : index
    %442 = vector.load %arg2[%c38, %c0_87] : memref<98x256xf32, #tpu.memory_space<vmem>>, vector<1x256xf32>
    %c87 = arith.constant 87 : index
    %c0_88 = arith.constant 0 : index
    %443 = vector.load %arg2[%c87, %c0_88] : memref<98x256xf32, #tpu.memory_space<vmem>>, vector<1x256xf32>
    %444 = vector.extract_strided_slice %441 {offsets = [0, 0], sizes = [2, 256], strides = [1, 1]} : vector<4x256xf32> to vector<2x256xf32>
    %445 = vector.broadcast %442 : vector<1x256xf32> to vector<2x256xf32>
    %446 = arith.mulf %444, %445 : vector<2x256xf32>
    %447 = arith.addf %440, %446 : vector<2x256xf32>
    %448 = vector.extract_strided_slice %441 {offsets = [2, 0], sizes = [2, 256], strides = [1, 1]} : vector<4x256xf32> to vector<2x256xf32>
    %449 = vector.broadcast %443 : vector<1x256xf32> to vector<2x256xf32>
    %450 = arith.mulf %448, %449 : vector<2x256xf32>
    %451 = arith.addf %447, %450 : vector<2x256xf32>
    %c223_i32 = arith.constant 223 : i32
    %452 = tpu.dynamic_rotate %22 by %c223_i32 dim 1 : vector<4x256xf32>, i32 -> vector<4x256xf32>
    %c39 = arith.constant 39 : index
    %c0_89 = arith.constant 0 : index
    %453 = vector.load %arg2[%c39, %c0_89] : memref<98x256xf32, #tpu.memory_space<vmem>>, vector<1x256xf32>
    %c88 = arith.constant 88 : index
    %c0_90 = arith.constant 0 : index
    %454 = vector.load %arg2[%c88, %c0_90] : memref<98x256xf32, #tpu.memory_space<vmem>>, vector<1x256xf32>
    %455 = vector.extract_strided_slice %452 {offsets = [0, 0], sizes = [2, 256], strides = [1, 1]} : vector<4x256xf32> to vector<2x256xf32>
    %456 = vector.broadcast %453 : vector<1x256xf32> to vector<2x256xf32>
    %457 = arith.mulf %455, %456 : vector<2x256xf32>
    %458 = arith.addf %451, %457 : vector<2x256xf32>
    %459 = vector.extract_strided_slice %452 {offsets = [2, 0], sizes = [2, 256], strides = [1, 1]} : vector<4x256xf32> to vector<2x256xf32>
    %460 = vector.broadcast %454 : vector<1x256xf32> to vector<2x256xf32>
    %461 = arith.mulf %459, %460 : vector<2x256xf32>
    %462 = arith.addf %458, %461 : vector<2x256xf32>
    %c222_i32 = arith.constant 222 : i32
    %463 = tpu.dynamic_rotate %22 by %c222_i32 dim 1 : vector<4x256xf32>, i32 -> vector<4x256xf32>
    %c40 = arith.constant 40 : index
    %c0_91 = arith.constant 0 : index
    %464 = vector.load %arg2[%c40, %c0_91] : memref<98x256xf32, #tpu.memory_space<vmem>>, vector<1x256xf32>
    %c89 = arith.constant 89 : index
    %c0_92 = arith.constant 0 : index
    %465 = vector.load %arg2[%c89, %c0_92] : memref<98x256xf32, #tpu.memory_space<vmem>>, vector<1x256xf32>
    %466 = vector.extract_strided_slice %463 {offsets = [0, 0], sizes = [2, 256], strides = [1, 1]} : vector<4x256xf32> to vector<2x256xf32>
    %467 = vector.broadcast %464 : vector<1x256xf32> to vector<2x256xf32>
    %468 = arith.mulf %466, %467 : vector<2x256xf32>
    %469 = arith.addf %462, %468 : vector<2x256xf32>
    %470 = vector.extract_strided_slice %463 {offsets = [2, 0], sizes = [2, 256], strides = [1, 1]} : vector<4x256xf32> to vector<2x256xf32>
    %471 = vector.broadcast %465 : vector<1x256xf32> to vector<2x256xf32>
    %472 = arith.mulf %470, %471 : vector<2x256xf32>
    %473 = arith.addf %469, %472 : vector<2x256xf32>
    %c221_i32 = arith.constant 221 : i32
    %474 = tpu.dynamic_rotate %22 by %c221_i32 dim 1 : vector<4x256xf32>, i32 -> vector<4x256xf32>
    %c41 = arith.constant 41 : index
    %c0_93 = arith.constant 0 : index
    %475 = vector.load %arg2[%c41, %c0_93] : memref<98x256xf32, #tpu.memory_space<vmem>>, vector<1x256xf32>
    %c90 = arith.constant 90 : index
    %c0_94 = arith.constant 0 : index
    %476 = vector.load %arg2[%c90, %c0_94] : memref<98x256xf32, #tpu.memory_space<vmem>>, vector<1x256xf32>
    %477 = vector.extract_strided_slice %474 {offsets = [0, 0], sizes = [2, 256], strides = [1, 1]} : vector<4x256xf32> to vector<2x256xf32>
    %478 = vector.broadcast %475 : vector<1x256xf32> to vector<2x256xf32>
    %479 = arith.mulf %477, %478 : vector<2x256xf32>
    %480 = arith.addf %473, %479 : vector<2x256xf32>
    %481 = vector.extract_strided_slice %474 {offsets = [2, 0], sizes = [2, 256], strides = [1, 1]} : vector<4x256xf32> to vector<2x256xf32>
    %482 = vector.broadcast %476 : vector<1x256xf32> to vector<2x256xf32>
    %483 = arith.mulf %481, %482 : vector<2x256xf32>
    %484 = arith.addf %480, %483 : vector<2x256xf32>
    %c211_i32 = arith.constant 211 : i32
    %485 = tpu.dynamic_rotate %22 by %c211_i32 dim 1 : vector<4x256xf32>, i32 -> vector<4x256xf32>
    %c42 = arith.constant 42 : index
    %c0_95 = arith.constant 0 : index
    %486 = vector.load %arg2[%c42, %c0_95] : memref<98x256xf32, #tpu.memory_space<vmem>>, vector<1x256xf32>
    %c91 = arith.constant 91 : index
    %c0_96 = arith.constant 0 : index
    %487 = vector.load %arg2[%c91, %c0_96] : memref<98x256xf32, #tpu.memory_space<vmem>>, vector<1x256xf32>
    %488 = vector.extract_strided_slice %485 {offsets = [0, 0], sizes = [2, 256], strides = [1, 1]} : vector<4x256xf32> to vector<2x256xf32>
    %489 = vector.broadcast %486 : vector<1x256xf32> to vector<2x256xf32>
    %490 = arith.mulf %488, %489 : vector<2x256xf32>
    %491 = arith.addf %484, %490 : vector<2x256xf32>
    %492 = vector.extract_strided_slice %485 {offsets = [2, 0], sizes = [2, 256], strides = [1, 1]} : vector<4x256xf32> to vector<2x256xf32>
    %493 = vector.broadcast %487 : vector<1x256xf32> to vector<2x256xf32>
    %494 = arith.mulf %492, %493 : vector<2x256xf32>
    %495 = arith.addf %491, %494 : vector<2x256xf32>
    %c210_i32 = arith.constant 210 : i32
    %496 = tpu.dynamic_rotate %22 by %c210_i32 dim 1 : vector<4x256xf32>, i32 -> vector<4x256xf32>
    %c43 = arith.constant 43 : index
    %c0_97 = arith.constant 0 : index
    %497 = vector.load %arg2[%c43, %c0_97] : memref<98x256xf32, #tpu.memory_space<vmem>>, vector<1x256xf32>
    %c92 = arith.constant 92 : index
    %c0_98 = arith.constant 0 : index
    %498 = vector.load %arg2[%c92, %c0_98] : memref<98x256xf32, #tpu.memory_space<vmem>>, vector<1x256xf32>
    %499 = vector.extract_strided_slice %496 {offsets = [0, 0], sizes = [2, 256], strides = [1, 1]} : vector<4x256xf32> to vector<2x256xf32>
    %500 = vector.broadcast %497 : vector<1x256xf32> to vector<2x256xf32>
    %501 = arith.mulf %499, %500 : vector<2x256xf32>
    %502 = arith.addf %495, %501 : vector<2x256xf32>
    %503 = vector.extract_strided_slice %496 {offsets = [2, 0], sizes = [2, 256], strides = [1, 1]} : vector<4x256xf32> to vector<2x256xf32>
    %504 = vector.broadcast %498 : vector<1x256xf32> to vector<2x256xf32>
    %505 = arith.mulf %503, %504 : vector<2x256xf32>
    %506 = arith.addf %502, %505 : vector<2x256xf32>
    %c209_i32 = arith.constant 209 : i32
    %507 = tpu.dynamic_rotate %22 by %c209_i32 dim 1 : vector<4x256xf32>, i32 -> vector<4x256xf32>
    %c44 = arith.constant 44 : index
    %c0_99 = arith.constant 0 : index
    %508 = vector.load %arg2[%c44, %c0_99] : memref<98x256xf32, #tpu.memory_space<vmem>>, vector<1x256xf32>
    %c93 = arith.constant 93 : index
    %c0_100 = arith.constant 0 : index
    %509 = vector.load %arg2[%c93, %c0_100] : memref<98x256xf32, #tpu.memory_space<vmem>>, vector<1x256xf32>
    %510 = vector.extract_strided_slice %507 {offsets = [0, 0], sizes = [2, 256], strides = [1, 1]} : vector<4x256xf32> to vector<2x256xf32>
    %511 = vector.broadcast %508 : vector<1x256xf32> to vector<2x256xf32>
    %512 = arith.mulf %510, %511 : vector<2x256xf32>
    %513 = arith.addf %506, %512 : vector<2x256xf32>
    %514 = vector.extract_strided_slice %507 {offsets = [2, 0], sizes = [2, 256], strides = [1, 1]} : vector<4x256xf32> to vector<2x256xf32>
    %515 = vector.broadcast %509 : vector<1x256xf32> to vector<2x256xf32>
    %516 = arith.mulf %514, %515 : vector<2x256xf32>
    %517 = arith.addf %513, %516 : vector<2x256xf32>
    %c208_i32 = arith.constant 208 : i32
    %518 = tpu.dynamic_rotate %22 by %c208_i32 dim 1 : vector<4x256xf32>, i32 -> vector<4x256xf32>
    %c45 = arith.constant 45 : index
    %c0_101 = arith.constant 0 : index
    %519 = vector.load %arg2[%c45, %c0_101] : memref<98x256xf32, #tpu.memory_space<vmem>>, vector<1x256xf32>
    %c94 = arith.constant 94 : index
    %c0_102 = arith.constant 0 : index
    %520 = vector.load %arg2[%c94, %c0_102] : memref<98x256xf32, #tpu.memory_space<vmem>>, vector<1x256xf32>
    %521 = vector.extract_strided_slice %518 {offsets = [0, 0], sizes = [2, 256], strides = [1, 1]} : vector<4x256xf32> to vector<2x256xf32>
    %522 = vector.broadcast %519 : vector<1x256xf32> to vector<2x256xf32>
    %523 = arith.mulf %521, %522 : vector<2x256xf32>
    %524 = arith.addf %517, %523 : vector<2x256xf32>
    %525 = vector.extract_strided_slice %518 {offsets = [2, 0], sizes = [2, 256], strides = [1, 1]} : vector<4x256xf32> to vector<2x256xf32>
    %526 = vector.broadcast %520 : vector<1x256xf32> to vector<2x256xf32>
    %527 = arith.mulf %525, %526 : vector<2x256xf32>
    %528 = arith.addf %524, %527 : vector<2x256xf32>
    %c207_i32 = arith.constant 207 : i32
    %529 = tpu.dynamic_rotate %22 by %c207_i32 dim 1 : vector<4x256xf32>, i32 -> vector<4x256xf32>
    %c46 = arith.constant 46 : index
    %c0_103 = arith.constant 0 : index
    %530 = vector.load %arg2[%c46, %c0_103] : memref<98x256xf32, #tpu.memory_space<vmem>>, vector<1x256xf32>
    %c95 = arith.constant 95 : index
    %c0_104 = arith.constant 0 : index
    %531 = vector.load %arg2[%c95, %c0_104] : memref<98x256xf32, #tpu.memory_space<vmem>>, vector<1x256xf32>
    %532 = vector.extract_strided_slice %529 {offsets = [0, 0], sizes = [2, 256], strides = [1, 1]} : vector<4x256xf32> to vector<2x256xf32>
    %533 = vector.broadcast %530 : vector<1x256xf32> to vector<2x256xf32>
    %534 = arith.mulf %532, %533 : vector<2x256xf32>
    %535 = arith.addf %528, %534 : vector<2x256xf32>
    %536 = vector.extract_strided_slice %529 {offsets = [2, 0], sizes = [2, 256], strides = [1, 1]} : vector<4x256xf32> to vector<2x256xf32>
    %537 = vector.broadcast %531 : vector<1x256xf32> to vector<2x256xf32>
    %538 = arith.mulf %536, %537 : vector<2x256xf32>
    %539 = arith.addf %535, %538 : vector<2x256xf32>
    %c206_i32 = arith.constant 206 : i32
    %540 = tpu.dynamic_rotate %22 by %c206_i32 dim 1 : vector<4x256xf32>, i32 -> vector<4x256xf32>
    %c47 = arith.constant 47 : index
    %c0_105 = arith.constant 0 : index
    %541 = vector.load %arg2[%c47, %c0_105] : memref<98x256xf32, #tpu.memory_space<vmem>>, vector<1x256xf32>
    %c96 = arith.constant 96 : index
    %c0_106 = arith.constant 0 : index
    %542 = vector.load %arg2[%c96, %c0_106] : memref<98x256xf32, #tpu.memory_space<vmem>>, vector<1x256xf32>
    %543 = vector.extract_strided_slice %540 {offsets = [0, 0], sizes = [2, 256], strides = [1, 1]} : vector<4x256xf32> to vector<2x256xf32>
    %544 = vector.broadcast %541 : vector<1x256xf32> to vector<2x256xf32>
    %545 = arith.mulf %543, %544 : vector<2x256xf32>
    %546 = arith.addf %539, %545 : vector<2x256xf32>
    %547 = vector.extract_strided_slice %540 {offsets = [2, 0], sizes = [2, 256], strides = [1, 1]} : vector<4x256xf32> to vector<2x256xf32>
    %548 = vector.broadcast %542 : vector<1x256xf32> to vector<2x256xf32>
    %549 = arith.mulf %547, %548 : vector<2x256xf32>
    %550 = arith.addf %546, %549 : vector<2x256xf32>
    %c205_i32 = arith.constant 205 : i32
    %551 = tpu.dynamic_rotate %22 by %c205_i32 dim 1 : vector<4x256xf32>, i32 -> vector<4x256xf32>
    %c48 = arith.constant 48 : index
    %c0_107 = arith.constant 0 : index
    %552 = vector.load %arg2[%c48, %c0_107] : memref<98x256xf32, #tpu.memory_space<vmem>>, vector<1x256xf32>
    %c97 = arith.constant 97 : index
    %c0_108 = arith.constant 0 : index
    %553 = vector.load %arg2[%c97, %c0_108] : memref<98x256xf32, #tpu.memory_space<vmem>>, vector<1x256xf32>
    %554 = vector.extract_strided_slice %551 {offsets = [0, 0], sizes = [2, 256], strides = [1, 1]} : vector<4x256xf32> to vector<2x256xf32>
    %555 = vector.broadcast %552 : vector<1x256xf32> to vector<2x256xf32>
    %556 = arith.mulf %554, %555 : vector<2x256xf32>
    %557 = arith.addf %550, %556 : vector<2x256xf32>
    %558 = vector.extract_strided_slice %551 {offsets = [2, 0], sizes = [2, 256], strides = [1, 1]} : vector<4x256xf32> to vector<2x256xf32>
    %559 = vector.broadcast %553 : vector<1x256xf32> to vector<2x256xf32>
    %560 = arith.mulf %558, %559 : vector<2x256xf32>
    %561 = arith.addf %557, %560 : vector<2x256xf32>
    %562 = arith.negf %561 : vector<2x256xf32>
    %563 = math.exp %562 : vector<2x256xf32>
    %cst_109 = arith.constant 1.000000e+00 : f32
    %564 = vector.broadcast %cst_109 : f32 to vector<2x256xf32>
    %565 = arith.addf %564, %563 : vector<2x256xf32>
    %566 = arith.divf %564, %565 : vector<2x256xf32>
    %567 = arith.index_cast %3 : i32 to index
    %c0_110 = arith.constant 0 : index
    %568 = vector.load %arg3[%567, %c0_110] : memref<2x256xf32, #tpu.memory_space<vmem>>, vector<2x256xf32>
    tpu.vector_store %arg3[%567, %c0_110], %566 {strides = array<i32>} : memref<2x256xf32, #tpu.memory_space<vmem>>, vector<2x256xf32>,
    %c1_i32_111 = arith.constant 1 : i32
    return
  }
  func.func @transform_0(%arg0: i32) -> (i32, i32, i32) {
    %c0_i32 = arith.constant 0 : i32
    %c0_i32_0 = arith.constant 0 : i32
    %c0_i32_1 = arith.constant 0 : i32
    return %arg0, %c0_i32, %c0_i32_0 : i32, i32, i32
  }
  func.func @transform_1(%arg0: i32) -> (i32, i32) {
    %c0_i32 = arith.constant 0 : i32
    %c0_i32_0 = arith.constant 0 : i32
    %c0_i32_1 = arith.constant 0 : i32
    return %c0_i32, %c0_i32_0 : i32, i32
  }
  func.func @transform_2(%arg0: i32) -> (i32, i32) {
    %c0_i32 = arith.constant 0 : i32
    %c0_i32_0 = arith.constant 0 : i32
    return %arg0, %c0_i32 : i32, i32
  }
}

</mosaic_0001>

<llo_original>
// kernel: spatial_attention.1
$region0: #{spatial_attention.1}
  #allocation0 [shape = 'u32[]', space=smem, size = 0x4, offset = 0x4, fixed_abs, tag = 'smem constant byte address 0x4 - core index']
  #allocation1 [shape = 'u32[144,128]{1,0:T(1,128)}', space=vmem, size = 0x12000, scoped, tag = 'internal scratch']
  %s0 = inlined_call_operand.vmem [shape: f32[2,4,256], index: 0, kind: input, shape index: {}]
  %s1 = inlined_call_operand.vmem [shape: f32[98,256], index: 1, kind: input, shape index: {}]
  %s2 = inlined_call_operand.vmem [shape: f32[2,256], index: 2, kind: output, shape index: {}]
  %s3 = sld [smem:[#allocation0]]
  $region18: #{spatial_attention.1} parent=0
    _
  %s5 = ssub.s32 1, %s3
  %s6 = scalar_select 0, %s5, %s3
  // Predicated region
  $region2: #{spatial_attention.1} parent=0 // pred_check
    _
  $region3: #{spatial_attention.1} parent=0 // pred_check_branch
    %8 = sbr.rel (0) target = $region5
  $region4: #{spatial_attention.1} parent=0 // pred_region
    _
  $region5: #{spatial_attention.1} parent=0 // pred_fallthru
    _
  // Predicated region
  $region6: #{spatial_attention.1} parent=0 // pred_check
    _
  $region7: #{spatial_attention.1} parent=0 // pred_check_branch
    %10 = sbr.rel (0) target = $region9
  $region8: #{spatial_attention.1} parent=0 // pred_region
    _
  $region9: #{spatial_attention.1} parent=0 // pred_fallthru
    _
  %s11 = smul.u32 0, 2
  %s12 = smul.addr %s11, 4
  %s13 = scalar_lea.vmem %s0, %s12
  %v14 = vld [vmem:[%s13] ss:$4 sm:$0x3]
  %s15 = scalar_lea.vmem %s13, 8
  %v16 = vld [vmem:[%s15] ss:$4 sm:$0x3]
  %s17 = scalar_lea.vmem %s13, 1
  %v18 = vld [vmem:[%s17] ss:$4 sm:$0x3]
  %s19 = scalar_lea.vmem %s13, 9
  %v20 = vld [vmem:[%s19] ss:$4 sm:$0x3]
  %v21 = vadd.f32 %v14, %v18
  %v22 = vadd.f32 %v16, %v20
  %v23 = vmax.f32 %v14, %v18
  %v24 = vmax.f32 %v16, %v20
  %s25 = scalar_lea.vmem %s13, 2
  %v26 = vld [vmem:[%s25] ss:$4 sm:$0x3]
  %s27 = scalar_lea.vmem %s13, 10
  %v28 = vld [vmem:[%s27] ss:$4 sm:$0x3]
  %v29 = vadd.f32 %v21, %v26
  %v30 = vadd.f32 %v22, %v28
  %v31 = vmax.f32 %v23, %v26
  %v32 = vmax.f32 %v24, %v28
  %s33 = scalar_lea.vmem %s13, 3
  %v34 = vld [vmem:[%s33] ss:$4 sm:$0x3]
  %s35 = scalar_lea.vmem %s13, 11
  %v36 = vld [vmem:[%s35] ss:$4 sm:$0x3]
  %v37 = vadd.f32 %v29, %v34
  %v38 = vadd.f32 %v30, %v36
  %v39 = vmax.f32 %v31, %v34
  %v40 = vmax.f32 %v32, %v36
  %v43 = vcombine.low %v37, %v38
  %v45 = vunpack.c.l.s4 1966171168
  %v46 = vunpack.c.0.s8 %v45
  %v47 = vlaneseq
  %v48 = vshrl.u32 %v47, 7
  %v49 = vsub.s32 %v46, %v48
  %v50 = vrot.slane %v43, %v49
  %v51 = vcombine.high %v50, %v50
  %v53 = vunpack.c.l.s4 1966171168
  %v54 = vunpack.c.0.s8 %v53
  %v55 = vlaneseq
  %v56 = vshrl.u32 %v55, 7
  %v57 = vsub.s32 %v54, %v56
  %v58 = vrot.slane %v50, %v57
  %v60 = vunpack.c.l.s4 1966171168
  %v61 = vunpack.c.0.s8 %v60
  %v62 = vlaneseq
  %v63 = vshrl.u32 %v62, 7
  %v64 = vsub.s32 %v61, %v63
  %v65 = vrot.slane %v51, %v64
  %v70 = vcombine.low %v39, %v40
  %v72 = vunpack.c.l.s4 1966171168
  %v73 = vunpack.c.0.s8 %v72
  %v74 = vlaneseq
  %v75 = vshrl.u32 %v74, 7
  %v76 = vsub.s32 %v73, %v75
  %v77 = vrot.slane %v70, %v76
  %v78 = vcombine.low %v77, %v77
  %v80 = vunpack.c.l.s4 1966171168
  %v81 = vunpack.c.0.s8 %v80
  %v82 = vlaneseq
  %v83 = vshrl.u32 %v82, 7
  %v84 = vsub.s32 %v81, %v83
  %v85 = vrot.slane %v78, %v84
  %v87 = vunpack.c.l.s4 1966171168
  %v88 = vunpack.c.0.s8 %v87
  %v89 = vlaneseq
  %v90 = vshrl.u32 %v89, 7
  %v91 = vsub.s32 %v88, %v90
  %v92 = vrot.slane %v77, %v91
  %vm95 = vcmask 1041408
  %v96 = vsel %vm95, %v58, %v85
  %v97 = vsel %vm95, %v65, %v92
  %98 = vrot.lane.b32.xlu0 %v96, 51
  %v99 = vpop.permute.xlu0 %98
  %100 = vrot.lane.b32.xlu0 %v97, 51
  %v101 = vpop.permute.xlu0 %100
  %v102 = vlaneseq
  %v103 = vand.u32 %v102, 127
  %vm104 = vcmp.lt.s32.totalorder %v103, 51
  %v105 = vsel %vm104, %v99, %v101
  %v106 = vsel %vm104, %v101, %v99
  %v107 = vld [vmem:[%s1] ss:$8 sm:$0x3]
  %s108 = scalar_lea.vmem %s1, 97
  %v109 = vld [vmem:[%s108] ss:$8 sm:$0x3]
  %v111 = vlaneseq
  %v112 = vshrl.u32 %v111, 7
  %v113 = vsub.s32 0, %v112
  %v114 = vrot.slane %v107, %v113
  %v115 = vlaneseq
  %v116 = vshrl.u32 %v115, 7
  %v117 = vsub.s32 1, %v116
  %v118 = vrot.slane %v107, %v117
  %v121 = vmul.f32 %v106, %v114
  %v122 = vmul.f32 %v105, %v118
  %v123 = vadd.f32 %v121, 0.0
  %v124 = vadd.f32 %v122, 0.0
  %v126 = vlaneseq
  %v127 = vshrl.u32 %v126, 7
  %v128 = vsub.s32 0, %v127
  %v129 = vrot.slane %v109, %v128
  %v130 = vlaneseq
  %v131 = vshrl.u32 %v130, 7
  %v132 = vsub.s32 1, %v131
  %v133 = vrot.slane %v109, %v132
  %v136 = vmul.f32 %v106, %v129
  %v137 = vmul.f32 %v105, %v133
  %v140 = vrot.slane %v136, 2
  %v141 = vrot.slane %v137, 2
  %v144 = vadd.f32 %v123, %v140
  %v145 = vadd.f32 %v124, %v141
  %146 = vrot.lane.b32.xlu0 %v96, 50
  %v147 = vpop.permute.xlu0 %146
  %148 = vrot.lane.b32.xlu0 %v97, 50
  %v149 = vpop.permute.xlu0 %148
  %vm150 = vcmp.lt.s32.totalorder %v103, 50
  %v151 = vsel %vm150, %v147, %v149
  %v152 = vsel %vm150, %v149, %v147
  %s153 = scalar_lea.vmem %s1, 1
  %v154 = vld [vmem:[%s153] ss:$8 sm:$0x3]
  %s155 = scalar_lea.vmem %s1, 98
  %v156 = vld [vmem:[%s155] ss:$8 sm:$0x3]
  %v158 = vlaneseq
  %v159 = vshrl.u32 %v158, 7
  %v160 = vsub.s32 0, %v159
  %v161 = vrot.slane %v154, %v160
  %v162 = vlaneseq
  %v163 = vshrl.u32 %v162, 7
  %v164 = vsub.s32 1, %v163
  %v165 = vrot.slane %v154, %v164
  %v168 = vmul.f32 %v152, %v161
  %v169 = vmul.f32 %v151, %v165
  %v170 = vadd.f32 %v144, %v168
  %v171 = vadd.f32 %v145, %v169
  %v173 = vlaneseq
  %v174 = vshrl.u32 %v173, 7
  %v175 = vsub.s32 0, %v174
  %v176 = vrot.slane %v156, %v175
  %v177 = vlaneseq
  %v178 = vshrl.u32 %v177, 7
  %v179 = vsub.s32 1, %v178
  %v180 = vrot.slane %v156, %v179
  %v183 = vmul.f32 %v152, %v176
  %v184 = vmul.f32 %v151, %v180
  %v187 = vrot.slane %v183, 2
  %v188 = vrot.slane %v184, 2
  %v191 = vadd.f32 %v170, %v187
  %v192 = vadd.f32 %v171, %v188
  %193 = vrot.lane.b32.xlu0 %v96, 49
  %v194 = vpop.permute.xlu0 %193
  %195 = vrot.lane.b32.xlu0 %v97, 49
  %v196 = vpop.permute.xlu0 %195
  %vm197 = vcmp.lt.s32.totalorder %v103, 49
  %v198 = vsel %vm197, %v194, %v196
  %v199 = vsel %vm197, %v196, %v194
  %s200 = scalar_lea.vmem %s1, 2
  %v201 = vld [vmem:[%s200] ss:$8 sm:$0x3]
  %s202 = scalar_lea.vmem %s1, 99
  %v203 = vld [vmem:[%s202] ss:$8 sm:$0x3]
  %v205 = vlaneseq
  %v206 = vshrl.u32 %v205, 7
  %v207 = vsub.s32 0, %v206
  %v208 = vrot.slane %v201, %v207
  %v209 = vlaneseq
  %v210 = vshrl.u32 %v209, 7
  %v211 = vsub.s32 1, %v210
  %v212 = vrot.slane %v201, %v211
  %v215 = vmul.f32 %v199, %v208
  %v216 = vmul.f32 %v198, %v212
  %v217 = vadd.f32 %v191, %v215
  %v218 = vadd.f32 %v192, %v216
  %v220 = vlaneseq
  %v221 = vshrl.u32 %v220, 7
  %v222 = vsub.s32 0, %v221
  %v223 = vrot.slane %v203, %v222
  %v224 = vlaneseq
  %v225 = vshrl.u32 %v224, 7
  %v226 = vsub.s32 1, %v225
  %v227 = vrot.slane %v203, %v226
  %v230 = vmul.f32 %v199, %v223
  %v231 = vmul.f32 %v198, %v227
  %v234 = vrot.slane %v230, 2
  %v235 = vrot.slane %v231, 2
  %v238 = vadd.f32 %v217, %v234
  %v239 = vadd.f32 %v218, %v235
  %240 = vrot.lane.b32.xlu0 %v96, 48
  %v241 = vpop.permute.xlu0 %240
  %242 = vrot.lane.b32.xlu0 %v97, 48
  %v243 = vpop.permute.xlu0 %242
  %vm244 = vcmp.lt.s32.totalorder %v103, 48
  %v245 = vsel %vm244, %v241, %v243
  %v246 = vsel %vm244, %v243, %v241
  %s247 = scalar_lea.vmem %s1, 3
  %v248 = vld [vmem:[%s247] ss:$8 sm:$0x3]
  %s249 = scalar_lea.vmem %s1, 100
  %v250 = vld [vmem:[%s249] ss:$8 sm:$0x3]
  %v252 = vlaneseq
  %v253 = vshrl.u32 %v252, 7
  %v254 = vsub.s32 0, %v253
  %v255 = vrot.slane %v248, %v254
  %v256 = vlaneseq
  %v257 = vshrl.u32 %v256, 7
  %v258 = vsub.s32 1, %v257
  %v259 = vrot.slane %v248, %v258
  %v262 = vmul.f32 %v246, %v255
  %v263 = vmul.f32 %v245, %v259
  %v264 = vadd.f32 %v238, %v262
  %v265 = vadd.f32 %v239, %v263
  %v267 = vlaneseq
  %v268 = vshrl.u32 %v267, 7
  %v269 = vsub.s32 0, %v268
  %v270 = vrot.slane %v250, %v269
  %v271 = vlaneseq
  %v272 = vshrl.u32 %v271, 7
  %v273 = vsub.s32 1, %v272
  %v274 = vrot.slane %v250, %v273
  %v277 = vmul.f32 %v246, %v270
  %v278 = vmul.f32 %v245, %v274
  %v281 = vrot.slane %v277, 2
  %v282 = vrot.slane %v278, 2
  %v285 = vadd.f32 %v264, %v281
  %v286 = vadd.f32 %v265, %v282
  %287 = vrot.lane.b32.xlu0 %v96, 47
  %v288 = vpop.permute.xlu0 %287
  %289 = vrot.lane.b32.xlu0 %v97, 47
  %v290 = vpop.permute.xlu0 %289
  %vm291 = vcmp.lt.s32.totalorder %v103, 47
  %v292 = vsel %vm291, %v288, %v290
  %v293 = vsel %vm291, %v290, %v288
  %s294 = scalar_lea.vmem %s1, 4
  %v295 = vld [vmem:[%s294] ss:$8 sm:$0x3]
  %s296 = scalar_lea.vmem %s1, 101
  %v297 = vld [vmem:[%s296] ss:$8 sm:$0x3]
  %v299 = vlaneseq
  %v300 = vshrl.u32 %v299, 7
  %v301 = vsub.s32 0, %v300
  %v302 = vrot.slane %v295, %v301
  %v303 = vlaneseq
  %v304 = vshrl.u32 %v303, 7
  %v305 = vsub.s32 1, %v304
  %v306 = vrot.slane %v295, %v305
  %v309 = vmul.f32 %v293, %v302
  %v310 = vmul.f32 %v292, %v306
  %v311 = vadd.f32 %v285, %v309
  %v312 = vadd.f32 %v286, %v310
  %v314 = vlaneseq
  %v315 = vshrl.u32 %v314, 7
  %v316 = vsub.s32 0, %v315
  %v317 = vrot.slane %v297, %v316
  %v318 = vlaneseq
  %v319 = vshrl.u32 %v318, 7
  %v320 = vsub.s32 1, %v319
  %v321 = vrot.slane %v297, %v320
  %v324 = vmul.f32 %v293, %v317
  %v325 = vmul.f32 %v292, %v321
  %v328 = vrot.slane %v324, 2
  %v329 = vrot.slane %v325, 2
  %v332 = vadd.f32 %v311, %v328
  %v333 = vadd.f32 %v312, %v329
  %334 = vrot.lane.b32.xlu0 %v96, 46
  %v335 = vpop.permute.xlu0 %334
  %336 = vrot.lane.b32.xlu0 %v97, 46
  %v337 = vpop.permute.xlu0 %336
  %vm338 = vcmp.lt.s32.totalorder %v103, 46
  %v339 = vsel %vm338, %v335, %v337
  %v340 = vsel %vm338, %v337, %v335
  %s341 = scalar_lea.vmem %s1, 5
  %v342 = vld [vmem:[%s341] ss:$8 sm:$0x3]
  %s343 = scalar_lea.vmem %s1, 102
  %v344 = vld [vmem:[%s343] ss:$8 sm:$0x3]
  %v346 = vlaneseq
  %v347 = vshrl.u32 %v346, 7
  %v348 = vsub.s32 0, %v347
  %v349 = vrot.slane %v342, %v348
  %v350 = vlaneseq
  %v351 = vshrl.u32 %v350, 7
  %v352 = vsub.s32 1, %v351
  %v353 = vrot.slane %v342, %v352
  %v356 = vmul.f32 %v340, %v349
  %v357 = vmul.f32 %v339, %v353
  %v358 = vadd.f32 %v332, %v356
  %v359 = vadd.f32 %v333, %v357
  %v361 = vlaneseq
  %v362 = vshrl.u32 %v361, 7
  %v363 = vsub.s32 0, %v362
  %v364 = vrot.slane %v344, %v363
  %v365 = vlaneseq
  %v366 = vshrl.u32 %v365, 7
  %v367 = vsub.s32 1, %v366
  %v368 = vrot.slane %v344, %v367
  %v371 = vmul.f32 %v340, %v364
  %v372 = vmul.f32 %v339, %v368
  %v375 = vrot.slane %v371, 2
  %v376 = vrot.slane %v372, 2
  %v379 = vadd.f32 %v358, %v375
  %v380 = vadd.f32 %v359, %v376
  %381 = vrot.lane.b32.xlu0 %v96, 45
  %v382 = vpop.permute.xlu0 %381
  %383 = vrot.lane.b32.xlu0 %v97, 45
  %v384 = vpop.permute.xlu0 %383
  %vm385 = vcmp.lt.s32.totalorder %v103, 45
  %v386 = vsel %vm385, %v382, %v384
  %v387 = vsel %vm385, %v384, %v382
  %s388 = scalar_lea.vmem %s1, 6
  %v389 = vld [vmem:[%s388] ss:$8 sm:$0x3]
  %s390 = scalar_lea.vmem %s1, 103
  %v391 = vld [vmem:[%s390] ss:$8 sm:$0x3]
  %v393 = vlaneseq
  %v394 = vshrl.u32 %v393, 7
  %v395 = vsub.s32 0, %v394
  %v396 = vrot.slane %v389, %v395
  %v397 = vlaneseq
  %v398 = vshrl.u32 %v397, 7
  %v399 = vsub.s32 1, %v398
  %v400 = vrot.slane %v389, %v399
  %v403 = vmul.f32 %v387, %v396
  %v404 = vmul.f32 %v386, %v400
  %v405 = vadd.f32 %v379, %v403
  %v406 = vadd.f32 %v380, %v404
  %v408 = vlaneseq
  %v409 = vshrl.u32 %v408, 7
  %v410 = vsub.s32 0, %v409
  %v411 = vrot.slane %v391, %v410
  %v412 = vlaneseq
  %v413 = vshrl.u32 %v412, 7
  %v414 = vsub.s32 1, %v413
  %v415 = vrot.slane %v391, %v414
  %v418 = vmul.f32 %v387, %v411
  %v419 = vmul.f32 %v386, %v415
  %v422 = vrot.slane %v418, 2
  %v423 = vrot.slane %v419, 2
  %v426 = vadd.f32 %v405, %v422
  %v427 = vadd.f32 %v406, %v423
  %428 = vrot.lane.b32.xlu0 %v96, 35
  %v429 = vpop.permute.xlu0 %428
  %430 = vrot.lane.b32.xlu0 %v97, 35
  %v431 = vpop.permute.xlu0 %430
  %vm432 = vcmp.lt.s32.totalorder %v103, 35
  %v433 = vsel %vm432, %v429, %v431
  %v434 = vsel %vm432, %v431, %v429
  %s435 = scalar_lea.vmem %s1, 7
  %v436 = vld [vmem:[%s435] ss:$8 sm:$0x3]
  %s437 = scalar_lea.vmem %s1, 112
  %v438 = vld [vmem:[%s437] ss:$8 sm:$0x3]
  %v440 = vlaneseq
  %v441 = vshrl.u32 %v440, 7
  %v442 = vsub.s32 0, %v441
  %v443 = vrot.slane %v436, %v442
  %v444 = vlaneseq
  %v445 = vshrl.u32 %v444, 7
  %v446 = vsub.s32 1, %v445
  %v447 = vrot.slane %v436, %v446
  %v450 = vmul.f32 %v434, %v443
  %v451 = vmul.f32 %v433, %v447
  %v452 = vadd.f32 %v426, %v450
  %v453 = vadd.f32 %v427, %v451
  %v455 = vlaneseq
  %v456 = vshrl.u32 %v455, 7
  %v457 = vsub.s32 0, %v456
  %v458 = vrot.slane %v438, %v457
  %v459 = vlaneseq
  %v460 = vshrl.u32 %v459, 7
  %v461 = vsub.s32 1, %v460
  %v462 = vrot.slane %v438, %v461
  %v465 = vmul.f32 %v434, %v458
  %v466 = vmul.f32 %v433, %v462
  %v469 = vrot.slane %v465, 2
  %v470 = vrot.slane %v466, 2
  %v473 = vadd.f32 %v452, %v469
  %v474 = vadd.f32 %v453, %v470
  %475 = vrot.lane.b32.xlu0 %v96, 34
  %v476 = vpop.permute.xlu0 %475
  %477 = vrot.lane.b32.xlu0 %v97, 34
  %v478 = vpop.permute.xlu0 %477
  %vm479 = vcmp.lt.s32.totalorder %v103, 34
  %v480 = vsel %vm479, %v476, %v478
  %v481 = vsel %vm479, %v478, %v476
  %s482 = scalar_lea.vmem %s1, 16
  %v483 = vld [vmem:[%s482] ss:$8 sm:$0x3]
  %s484 = scalar_lea.vmem %s1, 113
  %v485 = vld [vmem:[%s484] ss:$8 sm:$0x3]
  %v487 = vlaneseq
  %v488 = vshrl.u32 %v487, 7
  %v489 = vsub.s32 0, %v488
  %v490 = vrot.slane %v483, %v489
  %v491 = vlaneseq
  %v492 = vshrl.u32 %v491, 7
  %v493 = vsub.s32 1, %v492
  %v494 = vrot.slane %v483, %v493
  %v497 = vmul.f32 %v481, %v490
  %v498 = vmul.f32 %v480, %v494
  %v499 = vadd.f32 %v473, %v497
  %v500 = vadd.f32 %v474, %v498
  %v502 = vlaneseq
  %v503 = vshrl.u32 %v502, 7
  %v504 = vsub.s32 0, %v503
  %v505 = vrot.slane %v485, %v504
  %v506 = vlaneseq
  %v507 = vshrl.u32 %v506, 7
  %v508 = vsub.s32 1, %v507
  %v509 = vrot.slane %v485, %v508
  %v512 = vmul.f32 %v481, %v505
  %v513 = vmul.f32 %v480, %v509
  %v516 = vrot.slane %v512, 2
  %v517 = vrot.slane %v513, 2
  %v520 = vadd.f32 %v499, %v516
  %v521 = vadd.f32 %v500, %v517
  %522 = vrot.lane.b32.xlu0 %v96, 33
  %v523 = vpop.permute.xlu0 %522
  %524 = vrot.lane.b32.xlu0 %v97, 33
  %v525 = vpop.permute.xlu0 %524
  %vm526 = vcmp.lt.s32.totalorder %v103, 33
  %v527 = vsel %vm526, %v523, %v525
  %v528 = vsel %vm526, %v525, %v523
  %s529 = scalar_lea.vmem %s1, 17
  %v530 = vld [vmem:[%s529] ss:$8 sm:$0x3]
  %s531 = scalar_lea.vmem %s1, 114
  %v532 = vld [vmem:[%s531] ss:$8 sm:$0x3]
  %v534 = vlaneseq
  %v535 = vshrl.u32 %v534, 7
  %v536 = vsub.s32 0, %v535
  %v537 = vrot.slane %v530, %v536
  %v538 = vlaneseq
  %v539 = vshrl.u32 %v538, 7
  %v540 = vsub.s32 1, %v539
  %v541 = vrot.slane %v530, %v540
  %v544 = vmul.f32 %v528, %v537
  %v545 = vmul.f32 %v527, %v541
  %v546 = vadd.f32 %v520, %v544
  %v547 = vadd.f32 %v521, %v545
  %v549 = vlaneseq
  %v550 = vshrl.u32 %v549, 7
  %v551 = vsub.s32 0, %v550
  %v552 = vrot.slane %v532, %v551
  %v553 = vlaneseq
  %v554 = vshrl.u32 %v553, 7
  %v555 = vsub.s32 1, %v554
  %v556 = vrot.slane %v532, %v555
  %v559 = vmul.f32 %v528, %v552
  %v560 = vmul.f32 %v527, %v556
  %v563 = vrot.slane %v559, 2
  %v564 = vrot.slane %v560, 2
  %v567 = vadd.f32 %v546, %v563
  %v568 = vadd.f32 %v547, %v564
  %569 = vrot.lane.b32.xlu0 %v96, 32
  %v570 = vpop.permute.xlu0 %569
  %571 = vrot.lane.b32.xlu0 %v97, 32
  %v572 = vpop.permute.xlu0 %571
  %vm573 = vcmp.lt.s32.totalorder %v103, 32
  %v574 = vsel %vm573, %v570, %v572
  %v575 = vsel %vm573, %v572, %v570
  %s576 = scalar_lea.vmem %s1, 18
  %v577 = vld [vmem:[%s576] ss:$8 sm:$0x3]
  %s578 = scalar_lea.vmem %s1, 115
  %v579 = vld [vmem:[%s578] ss:$8 sm:$0x3]
  %v581 = vlaneseq
  %v582 = vshrl.u32 %v581, 7
  %v583 = vsub.s32 0, %v582
  %v584 = vrot.slane %v577, %v583
  %v585 = vlaneseq
  %v586 = vshrl.u32 %v585, 7
  %v587 = vsub.s32 1, %v586
  %v588 = vrot.slane %v577, %v587
  %v591 = vmul.f32 %v575, %v584
  %v592 = vmul.f32 %v574, %v588
  %v593 = vadd.f32 %v567, %v591
  %v594 = vadd.f32 %v568, %v592
  %v596 = vlaneseq
  %v597 = vshrl.u32 %v596, 7
  %v598 = vsub.s32 0, %v597
  %v599 = vrot.slane %v579, %v598
  %v600 = vlaneseq
  %v601 = vshrl.u32 %v600, 7
  %v602 = vsub.s32 1, %v601
  %v603 = vrot.slane %v579, %v602
  %v606 = vmul.f32 %v575, %v599
  %v607 = vmul.f32 %v574, %v603
  %v610 = vrot.slane %v606, 2
  %v611 = vrot.slane %v607, 2
  %v614 = vadd.f32 %v593, %v610
  %v615 = vadd.f32 %v594, %v611
  %616 = vrot.lane.b32.xlu0 %v96, 31
  %v617 = vpop.permute.xlu0 %616
  %618 = vrot.lane.b32.xlu0 %v97, 31
  %v619 = vpop.permute.xlu0 %618
  %vm620 = vcmp.lt.s32.totalorder %v103, 31
  %v621 = vsel %vm620, %v617, %v619
  %v622 = vsel %vm620, %v619, %v617
  %s623 = scalar_lea.vmem %s1, 19
  %v624 = vld [vmem:[%s623] ss:$8 sm:$0x3]
  %s625 = scalar_lea.vmem %s1, 116
  %v626 = vld [vmem:[%s625] ss:$8 sm:$0x3]
  %v628 = vlaneseq
  %v629 = vshrl.u32 %v628, 7
  %v630 = vsub.s32 0, %v629
  %v631 = vrot.slane %v624, %v630
  %v632 = vlaneseq
  %v633 = vshrl.u32 %v632, 7
  %v634 = vsub.s32 1, %v633
  %v635 = vrot.slane %v624, %v634
  %v638 = vmul.f32 %v622, %v631
  %v639 = vmul.f32 %v621, %v635
  %v640 = vadd.f32 %v614, %v638
  %v641 = vadd.f32 %v615, %v639
  %v643 = vlaneseq
  %v644 = vshrl.u32 %v643, 7
  %v645 = vsub.s32 0, %v644
  %v646 = vrot.slane %v626, %v645
  %v647 = vlaneseq
  %v648 = vshrl.u32 %v647, 7
  %v649 = vsub.s32 1, %v648
  %v650 = vrot.slane %v626, %v649
  %v653 = vmul.f32 %v622, %v646
  %v654 = vmul.f32 %v621, %v650
  %v657 = vrot.slane %v653, 2
  %v658 = vrot.slane %v654, 2
  %v661 = vadd.f32 %v640, %v657
  %v662 = vadd.f32 %v641, %v658
  %663 = vrot.lane.b32.xlu0 %v96, 30
  %v664 = vpop.permute.xlu0 %663
  %665 = vrot.lane.b32.xlu0 %v97, 30
  %v666 = vpop.permute.xlu0 %665
  %vm667 = vcmp.lt.s32.totalorder %v103, 30
  %v668 = vsel %vm667, %v664, %v666
  %v669 = vsel %vm667, %v666, %v664
  %s670 = scalar_lea.vmem %s1, 20
  %v671 = vld [vmem:[%s670] ss:$8 sm:$0x3]
  %s672 = scalar_lea.vmem %s1, 117
  %v673 = vld [vmem:[%s672] ss:$8 sm:$0x3]
  %v675 = vlaneseq
  %v676 = vshrl.u32 %v675, 7
  %v677 = vsub.s32 0, %v676
  %v678 = vrot.slane %v671, %v677
  %v679 = vlaneseq
  %v680 = vshrl.u32 %v679, 7
  %v681 = vsub.s32 1, %v680
  %v682 = vrot.slane %v671, %v681
  %v685 = vmul.f32 %v669, %v678
  %v686 = vmul.f32 %v668, %v682
  %v687 = vadd.f32 %v661, %v685
  %v688 = vadd.f32 %v662, %v686
  %v690 = vlaneseq
  %v691 = vshrl.u32 %v690, 7
  %v692 = vsub.s32 0, %v691
  %v693 = vrot.slane %v673, %v692
  %v694 = vlaneseq
  %v695 = vshrl.u32 %v694, 7
  %v696 = vsub.s32 1, %v695
  %v697 = vrot.slane %v673, %v696
  %v700 = vmul.f32 %v669, %v693
  %v701 = vmul.f32 %v668, %v697
  %v704 = vrot.slane %v700, 2
  %v705 = vrot.slane %v701, 2
  %v708 = vadd.f32 %v687, %v704
  %v709 = vadd.f32 %v688, %v705
  %710 = vrot.lane.b32.xlu0 %v96, 29
  %v711 = vpop.permute.xlu0 %710
  %712 = vrot.lane.b32.xlu0 %v97, 29
  %v713 = vpop.permute.xlu0 %712
  %vm714 = vcmp.lt.s32.totalorder %v103, 29
  %v715 = vsel %vm714, %v711, %v713
  %v716 = vsel %vm714, %v713, %v711
  %s717 = scalar_lea.vmem %s1, 21
  %v718 = vld [vmem:[%s717] ss:$8 sm:$0x3]
  %s719 = scalar_lea.vmem %s1, 118
  %v720 = vld [vmem:[%s719] ss:$8 sm:$0x3]
  %v722 = vlaneseq
  %v723 = vshrl.u32 %v722, 7
  %v724 = vsub.s32 0, %v723
  %v725 = vrot.slane %v718, %v724
  %v726 = vlaneseq
  %v727 = vshrl.u32 %v726, 7
  %v728 = vsub.s32 1, %v727
  %v729 = vrot.slane %v718, %v728
  %v732 = vmul.f32 %v716, %v725
  %v733 = vmul.f32 %v715, %v729
  %v734 = vadd.f32 %v708, %v732
  %v735 = vadd.f32 %v709, %v733
  %v737 = vlaneseq
  %v738 = vshrl.u32 %v737, 7
  %v739 = vsub.s32 0, %v738
  %v740 = vrot.slane %v720, %v739
  %v741 = vlaneseq
  %v742 = vshrl.u32 %v741, 7
  %v743 = vsub.s32 1, %v742
  %v744 = vrot.slane %v720, %v743
  %v747 = vmul.f32 %v716, %v740
  %v748 = vmul.f32 %v715, %v744
  %v751 = vrot.slane %v747, 2
  %v752 = vrot.slane %v748, 2
  %v755 = vadd.f32 %v734, %v751
  %v756 = vadd.f32 %v735, %v752
  %757 = vrot.lane.b32.xlu0 %v96, 19
  %v758 = vpop.permute.xlu0 %757
  %759 = vrot.lane.b32.xlu0 %v97, 19
  %v760 = vpop.permute.xlu0 %759
  %vm761 = vcmp.lt.s32.totalorder %v103, 19
  %v762 = vsel %vm761, %v758, %v760
  %v763 = vsel %vm761, %v760, %v758
  %s764 = scalar_lea.vmem %s1, 22
  %v765 = vld [vmem:[%s764] ss:$8 sm:$0x3]
  %s766 = scalar_lea.vmem %s1, 119
  %v767 = vld [vmem:[%s766] ss:$8 sm:$0x3]
  %v769 = vlaneseq
  %v770 = vshrl.u32 %v769, 7
  %v771 = vsub.s32 0, %v770
  %v772 = vrot.slane %v765, %v771
  %v773 = vlaneseq
  %v774 = vshrl.u32 %v773, 7
  %v775 = vsub.s32 1, %v774
  %v776 = vrot.slane %v765, %v775
  %v779 = vmul.f32 %v763, %v772
  %v780 = vmul.f32 %v762, %v776
  %v781 = vadd.f32 %v755, %v779
  %v782 = vadd.f32 %v756, %v780
  %v784 = vlaneseq
  %v785 = vshrl.u32 %v784, 7
  %v786 = vsub.s32 0, %v785
  %v787 = vrot.slane %v767, %v786
  %v788 = vlaneseq
  %v789 = vshrl.u32 %v788, 7
  %v790 = vsub.s32 1, %v789
  %v791 = vrot.slane %v767, %v790
  %v794 = vmul.f32 %v763, %v787
  %v795 = vmul.f32 %v762, %v791
  %v798 = vrot.slane %v794, 2
  %v799 = vrot.slane %v795, 2
  %v802 = vadd.f32 %v781, %v798
  %v803 = vadd.f32 %v782, %v799
  %804 = vrot.lane.b32.xlu0 %v96, 18
  %v805 = vpop.permute.xlu0 %804
  %806 = vrot.lane.b32.xlu0 %v97, 18
  %v807 = vpop.permute.xlu0 %806
  %vm808 = vcmp.lt.s32.totalorder %v103, 18
  %v809 = vsel %vm808, %v805, %v807
  %v810 = vsel %vm808, %v807, %v805
  %s811 = scalar_lea.vmem %s1, 23
  %v812 = vld [vmem:[%s811] ss:$8 sm:$0x3]
  %s813 = scalar_lea.vmem %s1, 128
  %v814 = vld [vmem:[%s813] ss:$8 sm:$0x3]
  %v816 = vlaneseq
  %v817 = vshrl.u32 %v816, 7
  %v818 = vsub.s32 0, %v817
  %v819 = vrot.slane %v812, %v818
  %v820 = vlaneseq
  %v821 = vshrl.u32 %v820, 7
  %v822 = vsub.s32 1, %v821
  %v823 = vrot.slane %v812, %v822
  %v826 = vmul.f32 %v810, %v819
  %v827 = vmul.f32 %v809, %v823
  %v828 = vadd.f32 %v802, %v826
  %v829 = vadd.f32 %v803, %v827
  %v831 = vlaneseq
  %v832 = vshrl.u32 %v831, 7
  %v833 = vsub.s32 0, %v832
  %v834 = vrot.slane %v814, %v833
  %v835 = vlaneseq
  %v836 = vshrl.u32 %v835, 7
  %v837 = vsub.s32 1, %v836
  %v838 = vrot.slane %v814, %v837
  %v841 = vmul.f32 %v810, %v834
  %v842 = vmul.f32 %v809, %v838
  %v845 = vrot.slane %v841, 2
  %v846 = vrot.slane %v842, 2
  %v849 = vadd.f32 %v828, %v845
  %v850 = vadd.f32 %v829, %v846
  %851 = vrot.lane.b32.xlu0 %v96, 17
  %v852 = vpop.permute.xlu0 %851
  %853 = vrot.lane.b32.xlu0 %v97, 17
  %v854 = vpop.permute.xlu0 %853
  %vm855 = vcmp.lt.s32.totalorder %v103, 17
  %v856 = vsel %vm855, %v852, %v854
  %v857 = vsel %vm855, %v854, %v852
  %s858 = scalar_lea.vmem %s1, 32
  %v859 = vld [vmem:[%s858] ss:$8 sm:$0x3]
  %s860 = scalar_lea.vmem %s1, 129
  %v861 = vld [vmem:[%s860] ss:$8 sm:$0x3]
  %v863 = vlaneseq
  %v864 = vshrl.u32 %v863, 7
  %v865 = vsub.s32 0, %v864
  %v866 = vrot.slane %v859, %v865
  %v867 = vlaneseq
  %v868 = vshrl.u32 %v867, 7
  %v869 = vsub.s32 1, %v868
  %v870 = vrot.slane %v859, %v869
  %v873 = vmul.f32 %v857, %v866
  %v874 = vmul.f32 %v856, %v870
  %v875 = vadd.f32 %v849, %v873
  %v876 = vadd.f32 %v850, %v874
  %v878 = vlaneseq
  %v879 = vshrl.u32 %v878, 7
  %v880 = vsub.s32 0, %v879
  %v881 = vrot.slane %v861, %v880
  %v882 = vlaneseq
  %v883 = vshrl.u32 %v882, 7
  %v884 = vsub.s32 1, %v883
  %v885 = vrot.slane %v861, %v884
  %v888 = vmul.f32 %v857, %v881
  %v889 = vmul.f32 %v856, %v885
  %v892 = vrot.slane %v888, 2
  %v893 = vrot.slane %v889, 2
  %v896 = vadd.f32 %v875, %v892
  %v897 = vadd.f32 %v876, %v893
  %898 = vrot.lane.b32.xlu0 %v96, 16
  %v899 = vpop.permute.xlu0 %898
  %900 = vrot.lane.b32.xlu0 %v97, 16
  %v901 = vpop.permute.xlu0 %900
  %vm902 = vcmp.lt.s32.totalorder %v103, 16
  %v903 = vsel %vm902, %v899, %v901
  %v904 = vsel %vm902, %v901, %v899
  %s905 = scalar_lea.vmem %s1, 33
  %v906 = vld [vmem:[%s905] ss:$8 sm:$0x3]
  %s907 = scalar_lea.vmem %s1, 130
  %v908 = vld [vmem:[%s907] ss:$8 sm:$0x3]
  %v910 = vlaneseq
  %v911 = vshrl.u32 %v910, 7
  %v912 = vsub.s32 0, %v911
  %v913 = vrot.slane %v906, %v912
  %v914 = vlaneseq
  %v915 = vshrl.u32 %v914, 7
  %v916 = vsub.s32 1, %v915
  %v917 = vrot.slane %v906, %v916
  %v920 = vmul.f32 %v904, %v913
  %v921 = vmul.f32 %v903, %v917
  %v922 = vadd.f32 %v896, %v920
  %v923 = vadd.f32 %v897, %v921
  %v925 = vlaneseq
  %v926 = vshrl.u32 %v925, 7
  %v927 = vsub.s32 0, %v926
  %v928 = vrot.slane %v908, %v927
  %v929 = vlaneseq
  %v930 = vshrl.u32 %v929, 7
  %v931 = vsub.s32 1, %v930
  %v932 = vrot.slane %v908, %v931
  %v935 = vmul.f32 %v904, %v928
  %v936 = vmul.f32 %v903, %v932
  %v939 = vrot.slane %v935, 2
  %v940 = vrot.slane %v936, 2
  %v943 = vadd.f32 %v922, %v939
  %v944 = vadd.f32 %v923, %v940
  %945 = vrot.lane.b32.xlu0 %v96, 15
  %v946 = vpop.permute.xlu0 %945
  %947 = vrot.lane.b32.xlu0 %v97, 15
  %v948 = vpop.permute.xlu0 %947
  %vm949 = vcmp.lt.s32.totalorder %v103, 15
  %v950 = vsel %vm949, %v946, %v948
  %v951 = vsel %vm949, %v948, %v946
  %s952 = scalar_lea.vmem %s1, 34
  %v953 = vld [vmem:[%s952] ss:$8 sm:$0x3]
  %s954 = scalar_lea.vmem %s1, 131
  %v955 = vld [vmem:[%s954] ss:$8 sm:$0x3]
  %v957 = vlaneseq
  %v958 = vshrl.u32 %v957, 7
  %v959 = vsub.s32 0, %v958
  %v960 = vrot.slane %v953, %v959
  %v961 = vlaneseq
  %v962 = vshrl.u32 %v961, 7
  %v963 = vsub.s32 1, %v962
  %v964 = vrot.slane %v953, %v963
  %v967 = vmul.f32 %v951, %v960
  %v968 = vmul.f32 %v950, %v964
  %v969 = vadd.f32 %v943, %v967
  %v970 = vadd.f32 %v944, %v968
  %v972 = vlaneseq
  %v973 = vshrl.u32 %v972, 7
  %v974 = vsub.s32 0, %v973
  %v975 = vrot.slane %v955, %v974
  %v976 = vlaneseq
  %v977 = vshrl.u32 %v976, 7
  %v978 = vsub.s32 1, %v977
  %v979 = vrot.slane %v955, %v978
  %v982 = vmul.f32 %v951, %v975
  %v983 = vmul.f32 %v950, %v979
  %v986 = vrot.slane %v982, 2
  %v987 = vrot.slane %v983, 2
  %v990 = vadd.f32 %v969, %v986
  %v991 = vadd.f32 %v970, %v987
  %992 = vrot.lane.b32.xlu0 %v96, 14
  %v993 = vpop.permute.xlu0 %992
  %994 = vrot.lane.b32.xlu0 %v97, 14
  %v995 = vpop.permute.xlu0 %994
  %vm996 = vcmp.lt.s32.totalorder %v103, 14
  %v997 = vsel %vm996, %v993, %v995
  %v998 = vsel %vm996, %v995, %v993
  %s999 = scalar_lea.vmem %s1, 35
  %v1000 = vld [vmem:[%s999] ss:$8 sm:$0x3]
  %s1001 = scalar_lea.vmem %s1, 132
  %v1002 = vld [vmem:[%s1001] ss:$8 sm:$0x3]
  %v1004 = vlaneseq
  %v1005 = vshrl.u32 %v1004, 7
  %v1006 = vsub.s32 0, %v1005
  %v1007 = vrot.slane %v1000, %v1006
  %v1008 = vlaneseq
  %v1009 = vshrl.u32 %v1008, 7
  %v1010 = vsub.s32 1, %v1009
  %v1011 = vrot.slane %v1000, %v1010
  %v1014 = vmul.f32 %v998, %v1007
  %v1015 = vmul.f32 %v997, %v1011
  %v1016 = vadd.f32 %v990, %v1014
  %v1017 = vadd.f32 %v991, %v1015
  %v1019 = vlaneseq
  %v1020 = vshrl.u32 %v1019, 7
  %v1021 = vsub.s32 0, %v1020
  %v1022 = vrot.slane %v1002, %v1021
  %v1023 = vlaneseq
  %v1024 = vshrl.u32 %v1023, 7
  %v1025 = vsub.s32 1, %v1024
  %v1026 = vrot.slane %v1002, %v1025
  %v1029 = vmul.f32 %v998, %v1022
  %v1030 = vmul.f32 %v997, %v1026
  %v1033 = vrot.slane %v1029, 2
  %v1034 = vrot.slane %v1030, 2
  %v1037 = vadd.f32 %v1016, %v1033
  %v1038 = vadd.f32 %v1017, %v1034
  %1039 = vrot.lane.b32.xlu0 %v96, 13
  %v1040 = vpop.permute.xlu0 %1039
  %1041 = vrot.lane.b32.xlu0 %v97, 13
  %v1042 = vpop.permute.xlu0 %1041
  %vm1043 = vcmp.lt.s32.totalorder %v103, 13
  %v1044 = vsel %vm1043, %v1040, %v1042
  %v1045 = vsel %vm1043, %v1042, %v1040
  %s1046 = scalar_lea.vmem %s1, 36
  %v1047 = vld [vmem:[%s1046] ss:$8 sm:$0x3]
  %s1048 = scalar_lea.vmem %s1, 133
  %v1049 = vld [vmem:[%s1048] ss:$8 sm:$0x3]
  %v1051 = vlaneseq
  %v1052 = vshrl.u32 %v1051, 7
  %v1053 = vsub.s32 0, %v1052
  %v1054 = vrot.slane %v1047, %v1053
  %v1055 = vlaneseq
  %v1056 = vshrl.u32 %v1055, 7
  %v1057 = vsub.s32 1, %v1056
  %v1058 = vrot.slane %v1047, %v1057
  %v1061 = vmul.f32 %v1045, %v1054
  %v1062 = vmul.f32 %v1044, %v1058
  %v1063 = vadd.f32 %v1037, %v1061
  %v1064 = vadd.f32 %v1038, %v1062
  %v1066 = vlaneseq
  %v1067 = vshrl.u32 %v1066, 7
  %v1068 = vsub.s32 0, %v1067
  %v1069 = vrot.slane %v1049, %v1068
  %v1070 = vlaneseq
  %v1071 = vshrl.u32 %v1070, 7
  %v1072 = vsub.s32 1, %v1071
  %v1073 = vrot.slane %v1049, %v1072
  %v1076 = vmul.f32 %v1045, %v1069
  %v1077 = vmul.f32 %v1044, %v1073
  %v1080 = vrot.slane %v1076, 2
  %v1081 = vrot.slane %v1077, 2
  %v1084 = vadd.f32 %v1063, %v1080
  %v1085 = vadd.f32 %v1064, %v1081
  %1086 = vrot.lane.b32.xlu0 %v96, 3
  %v1087 = vpop.permute.xlu0 %1086
  %1088 = vrot.lane.b32.xlu0 %v97, 3
  %v1089 = vpop.permute.xlu0 %1088
  %vm1090 = vcmp.lt.s32.totalorder %v103, 3
  %v1091 = vsel %vm1090, %v1087, %v1089
  %v1092 = vsel %vm1090, %v1089, %v1087
  %s1093 = scalar_lea.vmem %s1, 37
  %v1094 = vld [vmem:[%s1093] ss:$8 sm:$0x3]
  %s1095 = scalar_lea.vmem %s1, 134
  %v1096 = vld [vmem:[%s1095] ss:$8 sm:$0x3]
  %v1098 = vlaneseq
  %v1099 = vshrl.u32 %v1098, 7
  %v1100 = vsub.s32 0, %v1099
  %v1101 = vrot.slane %v1094, %v1100
  %v1102 = vlaneseq
  %v1103 = vshrl.u32 %v1102, 7
  %v1104 = vsub.s32 1, %v1103
  %v1105 = vrot.slane %v1094, %v1104
  %v1108 = vmul.f32 %v1092, %v1101
  %v1109 = vmul.f32 %v1091, %v1105
  %v1110 = vadd.f32 %v1084, %v1108
  %v1111 = vadd.f32 %v1085, %v1109
  %v1113 = vlaneseq
  %v1114 = vshrl.u32 %v1113, 7
  %v1115 = vsub.s32 0, %v1114
  %v1116 = vrot.slane %v1096, %v1115
  %v1117 = vlaneseq
  %v1118 = vshrl.u32 %v1117, 7
  %v1119 = vsub.s32 1, %v1118
  %v1120 = vrot.slane %v1096, %v1119
  %v1123 = vmul.f32 %v1092, %v1116
  %v1124 = vmul.f32 %v1091, %v1120
  %v1127 = vrot.slane %v1123, 2
  %v1128 = vrot.slane %v1124, 2
  %v1131 = vadd.f32 %v1110, %v1127
  %v1132 = vadd.f32 %v1111, %v1128
  %1133 = vrot.lane.b32.xlu0 %v96, 2
  %v1134 = vpop.permute.xlu0 %1133
  %1135 = vrot.lane.b32.xlu0 %v97, 2
  %v1136 = vpop.permute.xlu0 %1135
  %vm1137 = vcmp.lt.s32.totalorder %v103, 2
  %v1138 = vsel %vm1137, %v1134, %v1136
  %v1139 = vsel %vm1137, %v1136, %v1134
  %s1140 = scalar_lea.vmem %s1, 38
  %v1141 = vld [vmem:[%s1140] ss:$8 sm:$0x3]
  %s1142 = scalar_lea.vmem %s1, 135
  %v1143 = vld [vmem:[%s1142] ss:$8 sm:$0x3]
  %v1145 = vlaneseq
  %v1146 = vshrl.u32 %v1145, 7
  %v1147 = vsub.s32 0, %v1146
  %v1148 = vrot.slane %v1141, %v1147
  %v1149 = vlaneseq
  %v1150 = vshrl.u32 %v1149, 7
  %v1151 = vsub.s32 1, %v1150
  %v1152 = vrot.slane %v1141, %v1151
  %v1155 = vmul.f32 %v1139, %v1148
  %v1156 = vmul.f32 %v1138, %v1152
  %v1157 = vadd.f32 %v1131, %v1155
  %v1158 = vadd.f32 %v1132, %v1156
  %v1160 = vlaneseq
  %v1161 = vshrl.u32 %v1160, 7
  %v1162 = vsub.s32 0, %v1161
  %v1163 = vrot.slane %v1143, %v1162
  %v1164 = vlaneseq
  %v1165 = vshrl.u32 %v1164, 7
  %v1166 = vsub.s32 1, %v1165
  %v1167 = vrot.slane %v1143, %v1166
  %v1170 = vmul.f32 %v1139, %v1163
  %v1171 = vmul.f32 %v1138, %v1167
  %v1174 = vrot.slane %v1170, 2
  %v1175 = vrot.slane %v1171, 2
  %v1178 = vadd.f32 %v1157, %v1174
  %v1179 = vadd.f32 %v1158, %v1175
  %1180 = vrot.lane.b32.xlu0 %v96, 1
  %v1181 = vpop.permute.xlu0 %1180
  %1182 = vrot.lane.b32.xlu0 %v97, 1
  %v1183 = vpop.permute.xlu0 %1182
  %vm1184 = vcmp.lt.s32.totalorder %v103, 1
  %v1185 = vsel %vm1184, %v1181, %v1183
  %v1186 = vsel %vm1184, %v1183, %v1181
  %s1187 = scalar_lea.vmem %s1, 39
  %v1188 = vld [vmem:[%s1187] ss:$8 sm:$0x3]
  %s1189 = scalar_lea.vmem %s1, 144
  %v1190 = vld [vmem:[%s1189] ss:$8 sm:$0x3]
  %v1192 = vlaneseq
  %v1193 = vshrl.u32 %v1192, 7
  %v1194 = vsub.s32 0, %v1193
  %v1195 = vrot.slane %v1188, %v1194
  %v1196 = vlaneseq
  %v1197 = vshrl.u32 %v1196, 7
  %v1198 = vsub.s32 1, %v1197
  %v1199 = vrot.slane %v1188, %v1198
  %v1202 = vmul.f32 %v1186, %v1195
  %v1203 = vmul.f32 %v1185, %v1199
  %v1204 = vadd.f32 %v1178, %v1202
  %v1205 = vadd.f32 %v1179, %v1203
  %v1207 = vlaneseq
  %v1208 = vshrl.u32 %v1207, 7
  %v1209 = vsub.s32 0, %v1208
  %v1210 = vrot.slane %v1190, %v1209
  %v1211 = vlaneseq
  %v1212 = vshrl.u32 %v1211, 7
  %v1213 = vsub.s32 1, %v1212
  %v1214 = vrot.slane %v1190, %v1213
  %v1217 = vmul.f32 %v1186, %v1210
  %v1218 = vmul.f32 %v1185, %v1214
  %v1221 = vrot.slane %v1217, 2
  %v1222 = vrot.slane %v1218, 2
  %v1225 = vadd.f32 %v1204, %v1221
  %v1226 = vadd.f32 %v1205, %v1222
  %s1227 = scalar_lea.vmem %s1, 48
  %v1228 = vld [vmem:[%s1227] ss:$8 sm:$0x3]
  %s1229 = scalar_lea.vmem %s1, 145
  %v1230 = vld [vmem:[%s1229] ss:$8 sm:$0x3]
  %v1232 = vlaneseq
  %v1233 = vshrl.u32 %v1232, 7
  %v1234 = vsub.s32 0, %v1233
  %v1235 = vrot.slane %v1228, %v1234
  %v1236 = vlaneseq
  %v1237 = vshrl.u32 %v1236, 7
  %v1238 = vsub.s32 1, %v1237
  %v1239 = vrot.slane %v1228, %v1238
  %v1242 = vmul.f32 %v96, %v1235
  %v1243 = vmul.f32 %v97, %v1239
  %v1244 = vadd.f32 %v1225, %v1242
  %v1245 = vadd.f32 %v1226, %v1243
  %v1247 = vlaneseq
  %v1248 = vshrl.u32 %v1247, 7
  %v1249 = vsub.s32 0, %v1248
  %v1250 = vrot.slane %v1230, %v1249
  %v1251 = vlaneseq
  %v1252 = vshrl.u32 %v1251, 7
  %v1253 = vsub.s32 1, %v1252
  %v1254 = vrot.slane %v1230, %v1253
  %v1257 = vmul.f32 %v96, %v1250
  %v1258 = vmul.f32 %v97, %v1254
  %v1261 = vrot.slane %v1257, 2
  %v1262 = vrot.slane %v1258, 2
  %v1265 = vadd.f32 %v1244, %v1261
  %v1266 = vadd.f32 %v1245, %v1262
  %1267 = vrot.lane.b32.xlu0 %v96, 127
  %v1268 = vpop.permute.xlu0 %1267
  %1269 = vrot.lane.b32.xlu0 %v97, 127
  %v1270 = vpop.permute.xlu0 %1269
  %vm1271 = vcmp.lt.s32.totalorder %v103, 127
  %v1272 = vsel %vm1271, %v1268, %v1270
  %v1273 = vsel %vm1271, %v1270, %v1268
  %s1274 = scalar_lea.vmem %s1, 49
  %v1275 = vld [vmem:[%s1274] ss:$8 sm:$0x3]
  %s1276 = scalar_lea.vmem %s1, 146
  %v1277 = vld [vmem:[%s1276] ss:$8 sm:$0x3]
  %v1279 = vlaneseq
  %v1280 = vshrl.u32 %v1279, 7
  %v1281 = vsub.s32 0, %v1280
  %v1282 = vrot.slane %v1275, %v1281
  %v1283 = vlaneseq
  %v1284 = vshrl.u32 %v1283, 7
  %v1285 = vsub.s32 1, %v1284
  %v1286 = vrot.slane %v1275, %v1285
  %v1289 = vmul.f32 %v1272, %v1282
  %v1290 = vmul.f32 %v1273, %v1286
  %v1291 = vadd.f32 %v1265, %v1289
  %v1292 = vadd.f32 %v1266, %v1290
  %v1294 = vlaneseq
  %v1295 = vshrl.u32 %v1294, 7
  %v1296 = vsub.s32 0, %v1295
  %v1297 = vrot.slane %v1277, %v1296
  %v1298 = vlaneseq
  %v1299 = vshrl.u32 %v1298, 7
  %v1300 = vsub.s32 1, %v1299
  %v1301 = vrot.slane %v1277, %v1300
  %v1304 = vmul.f32 %v1272, %v1297
  %v1305 = vmul.f32 %v1273, %v1301
  %v1308 = vrot.slane %v1304, 2
  %v1309 = vrot.slane %v1305, 2
  %v1312 = vadd.f32 %v1291, %v1308
  %v1313 = vadd.f32 %v1292, %v1309
  %1314 = vrot.lane.b32.xlu0 %v96, 126
  %v1315 = vpop.permute.xlu0 %1314
  %1316 = vrot.lane.b32.xlu0 %v97, 126
  %v1317 = vpop.permute.xlu0 %1316
  %vm1318 = vcmp.lt.s32.totalorder %v103, 126
  %v1319 = vsel %vm1318, %v1315, %v1317
  %v1320 = vsel %vm1318, %v1317, %v1315
  %s1321 = scalar_lea.vmem %s1, 50
  %v1322 = vld [vmem:[%s1321] ss:$8 sm:$0x3]
  %s1323 = scalar_lea.vmem %s1, 147
  %v1324 = vld [vmem:[%s1323] ss:$8 sm:$0x3]
  %v1326 = vlaneseq
  %v1327 = vshrl.u32 %v1326, 7
  %v1328 = vsub.s32 0, %v1327
  %v1329 = vrot.slane %v1322, %v1328
  %v1330 = vlaneseq
  %v1331 = vshrl.u32 %v1330, 7
  %v1332 = vsub.s32 1, %v1331
  %v1333 = vrot.slane %v1322, %v1332
  %v1336 = vmul.f32 %v1319, %v1329
  %v1337 = vmul.f32 %v1320, %v1333
  %v1338 = vadd.f32 %v1312, %v1336
  %v1339 = vadd.f32 %v1313, %v1337
  %v1341 = vlaneseq
  %v1342 = vshrl.u32 %v1341, 7
  %v1343 = vsub.s32 0, %v1342
  %v1344 = vrot.slane %v1324, %v1343
  %v1345 = vlaneseq
  %v1346 = vshrl.u32 %v1345, 7
  %v1347 = vsub.s32 1, %v1346
  %v1348 = vrot.slane %v1324, %v1347
  %v1351 = vmul.f32 %v1319, %v1344
  %v1352 = vmul.f32 %v1320, %v1348
  %v1355 = vrot.slane %v1351, 2
  %v1356 = vrot.slane %v1352, 2
  %v1359 = vadd.f32 %v1338, %v1355
  %v1360 = vadd.f32 %v1339, %v1356
  %1361 = vrot.lane.b32.xlu0 %v96, 125
  %v1362 = vpop.permute.xlu0 %1361
  %1363 = vrot.lane.b32.xlu0 %v97, 125
  %v1364 = vpop.permute.xlu0 %1363
  %vm1365 = vcmp.lt.s32.totalorder %v103, 125
  %v1366 = vsel %vm1365, %v1362, %v1364
  %v1367 = vsel %vm1365, %v1364, %v1362
  %s1368 = scalar_lea.vmem %s1, 51
  %v1369 = vld [vmem:[%s1368] ss:$8 sm:$0x3]
  %s1370 = scalar_lea.vmem %s1, 148
  %v1371 = vld [vmem:[%s1370] ss:$8 sm:$0x3]
  %v1373 = vlaneseq
  %v1374 = vshrl.u32 %v1373, 7
  %v1375 = vsub.s32 0, %v1374
  %v1376 = vrot.slane %v1369, %v1375
  %v1377 = vlaneseq
  %v1378 = vshrl.u32 %v1377, 7
  %v1379 = vsub.s32 1, %v1378
  %v1380 = vrot.slane %v1369, %v1379
  %v1383 = vmul.f32 %v1366, %v1376
  %v1384 = vmul.f32 %v1367, %v1380
  %v1385 = vadd.f32 %v1359, %v1383
  %v1386 = vadd.f32 %v1360, %v1384
  %v1388 = vlaneseq
  %v1389 = vshrl.u32 %v1388, 7
  %v1390 = vsub.s32 0, %v1389
  %v1391 = vrot.slane %v1371, %v1390
  %v1392 = vlaneseq
  %v1393 = vshrl.u32 %v1392, 7
  %v1394 = vsub.s32 1, %v1393
  %v1395 = vrot.slane %v1371, %v1394
  %v1398 = vmul.f32 %v1366, %v1391
  %v1399 = vmul.f32 %v1367, %v1395
  %v1402 = vrot.slane %v1398, 2
  %v1403 = vrot.slane %v1399, 2
  %v1406 = vadd.f32 %v1385, %v1402
  %v1407 = vadd.f32 %v1386, %v1403
  %1408 = vrot.lane.b32.xlu0 %v96, 115
  %v1409 = vpop.permute.xlu0 %1408
  %1410 = vrot.lane.b32.xlu0 %v97, 115
  %v1411 = vpop.permute.xlu0 %1410
  %vm1412 = vcmp.lt.s32.totalorder %v103, 115
  %v1413 = vsel %vm1412, %v1409, %v1411
  %v1414 = vsel %vm1412, %v1411, %v1409
  %s1415 = scalar_lea.vmem %s1, 52
  %v1416 = vld [vmem:[%s1415] ss:$8 sm:$0x3]
  %s1417 = scalar_lea.vmem %s1, 149
  %v1418 = vld [vmem:[%s1417] ss:$8 sm:$0x3]
  %v1420 = vlaneseq
  %v1421 = vshrl.u32 %v1420, 7
  %v1422 = vsub.s32 0, %v1421
  %v1423 = vrot.slane %v1416, %v1422
  %v1424 = vlaneseq
  %v1425 = vshrl.u32 %v1424, 7
  %v1426 = vsub.s32 1, %v1425
  %v1427 = vrot.slane %v1416, %v1426
  %v1430 = vmul.f32 %v1413, %v1423
  %v1431 = vmul.f32 %v1414, %v1427
  %v1432 = vadd.f32 %v1406, %v1430
  %v1433 = vadd.f32 %v1407, %v1431
  %v1435 = vlaneseq
  %v1436 = vshrl.u32 %v1435, 7
  %v1437 = vsub.s32 0, %v1436
  %v1438 = vrot.slane %v1418, %v1437
  %v1439 = vlaneseq
  %v1440 = vshrl.u32 %v1439, 7
  %v1441 = vsub.s32 1, %v1440
  %v1442 = vrot.slane %v1418, %v1441
  %v1445 = vmul.f32 %v1413, %v1438
  %v1446 = vmul.f32 %v1414, %v1442
  %v1449 = vrot.slane %v1445, 2
  %v1450 = vrot.slane %v1446, 2
  %v1453 = vadd.f32 %v1432, %v1449
  %v1454 = vadd.f32 %v1433, %v1450
  %1455 = vrot.lane.b32.xlu0 %v96, 114
  %v1456 = vpop.permute.xlu0 %1455
  %1457 = vrot.lane.b32.xlu0 %v97, 114
  %v1458 = vpop.permute.xlu0 %1457
  %vm1459 = vcmp.lt.s32.totalorder %v103, 114
  %v1460 = vsel %vm1459, %v1456, %v1458
  %v1461 = vsel %vm1459, %v1458, %v1456
  %s1462 = scalar_lea.vmem %s1, 53
  %v1463 = vld [vmem:[%s1462] ss:$8 sm:$0x3]
  %s1464 = scalar_lea.vmem %s1, 150
  %v1465 = vld [vmem:[%s1464] ss:$8 sm:$0x3]
  %v1467 = vlaneseq
  %v1468 = vshrl.u32 %v1467, 7
  %v1469 = vsub.s32 0, %v1468
  %v1470 = vrot.slane %v1463, %v1469
  %v1471 = vlaneseq
  %v1472 = vshrl.u32 %v1471, 7
  %v1473 = vsub.s32 1, %v1472
  %v1474 = vrot.slane %v1463, %v1473
  %v1477 = vmul.f32 %v1460, %v1470
  %v1478 = vmul.f32 %v1461, %v1474
  %v1479 = vadd.f32 %v1453, %v1477
  %v1480 = vadd.f32 %v1454, %v1478
  %v1482 = vlaneseq
  %v1483 = vshrl.u32 %v1482, 7
  %v1484 = vsub.s32 0, %v1483
  %v1485 = vrot.slane %v1465, %v1484
  %v1486 = vlaneseq
  %v1487 = vshrl.u32 %v1486, 7
  %v1488 = vsub.s32 1, %v1487
  %v1489 = vrot.slane %v1465, %v1488
  %v1492 = vmul.f32 %v1460, %v1485
  %v1493 = vmul.f32 %v1461, %v1489
  %v1496 = vrot.slane %v1492, 2
  %v1497 = vrot.slane %v1493, 2
  %v1500 = vadd.f32 %v1479, %v1496
  %v1501 = vadd.f32 %v1480, %v1497
  %1502 = vrot.lane.b32.xlu0 %v96, 113
  %v1503 = vpop.permute.xlu0 %1502
  %1504 = vrot.lane.b32.xlu0 %v97, 113
  %v1505 = vpop.permute.xlu0 %1504
  %vm1506 = vcmp.lt.s32.totalorder %v103, 113
  %v1507 = vsel %vm1506, %v1503, %v1505
  %v1508 = vsel %vm1506, %v1505, %v1503
  %s1509 = scalar_lea.vmem %s1, 54
  %v1510 = vld [vmem:[%s1509] ss:$8 sm:$0x3]
  %s1511 = scalar_lea.vmem %s1, 151
  %v1512 = vld [vmem:[%s1511] ss:$8 sm:$0x3]
  %v1514 = vlaneseq
  %v1515 = vshrl.u32 %v1514, 7
  %v1516 = vsub.s32 0, %v1515
  %v1517 = vrot.slane %v1510, %v1516
  %v1518 = vlaneseq
  %v1519 = vshrl.u32 %v1518, 7
  %v1520 = vsub.s32 1, %v1519
  %v1521 = vrot.slane %v1510, %v1520
  %v1524 = vmul.f32 %v1507, %v1517
  %v1525 = vmul.f32 %v1508, %v1521
  %v1526 = vadd.f32 %v1500, %v1524
  %v1527 = vadd.f32 %v1501, %v1525
  %v1529 = vlaneseq
  %v1530 = vshrl.u32 %v1529, 7
  %v1531 = vsub.s32 0, %v1530
  %v1532 = vrot.slane %v1512, %v1531
  %v1533 = vlaneseq
  %v1534 = vshrl.u32 %v1533, 7
  %v1535 = vsub.s32 1, %v1534
  %v1536 = vrot.slane %v1512, %v1535
  %v1539 = vmul.f32 %v1507, %v1532
  %v1540 = vmul.f32 %v1508, %v1536
  %v1543 = vrot.slane %v1539, 2
  %v1544 = vrot.slane %v1540, 2
  %v1547 = vadd.f32 %v1526, %v1543
  %v1548 = vadd.f32 %v1527, %v1544
  %1549 = vrot.lane.b32.xlu0 %v96, 112
  %v1550 = vpop.permute.xlu0 %1549
  %1551 = vrot.lane.b32.xlu0 %v97, 112
  %v1552 = vpop.permute.xlu0 %1551
  %vm1553 = vcmp.lt.s32.totalorder %v103, 112
  %v1554 = vsel %vm1553, %v1550, %v1552
  %v1555 = vsel %vm1553, %v1552, %v1550
  %s1556 = scalar_lea.vmem %s1, 55
  %v1557 = vld [vmem:[%s1556] ss:$8 sm:$0x3]
  %s1558 = scalar_lea.vmem %s1, 160
  %v1559 = vld [vmem:[%s1558] ss:$8 sm:$0x3]
  %v1561 = vlaneseq
  %v1562 = vshrl.u32 %v1561, 7
  %v1563 = vsub.s32 0, %v1562
  %v1564 = vrot.slane %v1557, %v1563
  %v1565 = vlaneseq
  %v1566 = vshrl.u32 %v1565, 7
  %v1567 = vsub.s32 1, %v1566
  %v1568 = vrot.slane %v1557, %v1567
  %v1571 = vmul.f32 %v1554, %v1564
  %v1572 = vmul.f32 %v1555, %v1568
  %v1573 = vadd.f32 %v1547, %v1571
  %v1574 = vadd.f32 %v1548, %v1572
  %v1576 = vlaneseq
  %v1577 = vshrl.u32 %v1576, 7
  %v1578 = vsub.s32 0, %v1577
  %v1579 = vrot.slane %v1559, %v1578
  %v1580 = vlaneseq
  %v1581 = vshrl.u32 %v1580, 7
  %v1582 = vsub.s32 1, %v1581
  %v1583 = vrot.slane %v1559, %v1582
  %v1586 = vmul.f32 %v1554, %v1579
  %v1587 = vmul.f32 %v1555, %v1583
  %v1590 = vrot.slane %v1586, 2
  %v1591 = vrot.slane %v1587, 2
  %v1594 = vadd.f32 %v1573, %v1590
  %v1595 = vadd.f32 %v1574, %v1591
  %1596 = vrot.lane.b32.xlu0 %v96, 111
  %v1597 = vpop.permute.xlu0 %1596
  %1598 = vrot.lane.b32.xlu0 %v97, 111
  %v1599 = vpop.permute.xlu0 %1598
  %vm1600 = vcmp.lt.s32.totalorder %v103, 111
  %v1601 = vsel %vm1600, %v1597, %v1599
  %v1602 = vsel %vm1600, %v1599, %v1597
  %s1603 = scalar_lea.vmem %s1, 64
  %v1604 = vld [vmem:[%s1603] ss:$8 sm:$0x3]
  %s1605 = scalar_lea.vmem %s1, 161
  %v1606 = vld [vmem:[%s1605] ss:$8 sm:$0x3]
  %v1608 = vlaneseq
  %v1609 = vshrl.u32 %v1608, 7
  %v1610 = vsub.s32 0, %v1609
  %v1611 = vrot.slane %v1604, %v1610
  %v1612 = vlaneseq
  %v1613 = vshrl.u32 %v1612, 7
  %v1614 = vsub.s32 1, %v1613
  %v1615 = vrot.slane %v1604, %v1614
  %v1618 = vmul.f32 %v1601, %v1611
  %v1619 = vmul.f32 %v1602, %v1615
  %v1620 = vadd.f32 %v1594, %v1618
  %v1621 = vadd.f32 %v1595, %v1619
  %v1623 = vlaneseq
  %v1624 = vshrl.u32 %v1623, 7
  %v1625 = vsub.s32 0, %v1624
  %v1626 = vrot.slane %v1606, %v1625
  %v1627 = vlaneseq
  %v1628 = vshrl.u32 %v1627, 7
  %v1629 = vsub.s32 1, %v1628
  %v1630 = vrot.slane %v1606, %v1629
  %v1633 = vmul.f32 %v1601, %v1626
  %v1634 = vmul.f32 %v1602, %v1630
  %v1637 = vrot.slane %v1633, 2
  %v1638 = vrot.slane %v1634, 2
  %v1641 = vadd.f32 %v1620, %v1637
  %v1642 = vadd.f32 %v1621, %v1638
  %1643 = vrot.lane.b32.xlu0 %v96, 110
  %v1644 = vpop.permute.xlu0 %1643
  %1645 = vrot.lane.b32.xlu0 %v97, 110
  %v1646 = vpop.permute.xlu0 %1645
  %vm1647 = vcmp.lt.s32.totalorder %v103, 110
  %v1648 = vsel %vm1647, %v1644, %v1646
  %v1649 = vsel %vm1647, %v1646, %v1644
  %s1650 = scalar_lea.vmem %s1, 65
  %v1651 = vld [vmem:[%s1650] ss:$8 sm:$0x3]
  %s1652 = scalar_lea.vmem %s1, 162
  %v1653 = vld [vmem:[%s1652] ss:$8 sm:$0x3]
  %v1655 = vlaneseq
  %v1656 = vshrl.u32 %v1655, 7
  %v1657 = vsub.s32 0, %v1656
  %v1658 = vrot.slane %v1651, %v1657
  %v1659 = vlaneseq
  %v1660 = vshrl.u32 %v1659, 7
  %v1661 = vsub.s32 1, %v1660
  %v1662 = vrot.slane %v1651, %v1661
  %v1665 = vmul.f32 %v1648, %v1658
  %v1666 = vmul.f32 %v1649, %v1662
  %v1667 = vadd.f32 %v1641, %v1665
  %v1668 = vadd.f32 %v1642, %v1666
  %v1670 = vlaneseq
  %v1671 = vshrl.u32 %v1670, 7
  %v1672 = vsub.s32 0, %v1671
  %v1673 = vrot.slane %v1653, %v1672
  %v1674 = vlaneseq
  %v1675 = vshrl.u32 %v1674, 7
  %v1676 = vsub.s32 1, %v1675
  %v1677 = vrot.slane %v1653, %v1676
  %v1680 = vmul.f32 %v1648, %v1673
  %v1681 = vmul.f32 %v1649, %v1677
  %v1684 = vrot.slane %v1680, 2
  %v1685 = vrot.slane %v1681, 2
  %v1688 = vadd.f32 %v1667, %v1684
  %v1689 = vadd.f32 %v1668, %v1685
  %1690 = vrot.lane.b32.xlu0 %v96, 109
  %v1691 = vpop.permute.xlu0 %1690
  %1692 = vrot.lane.b32.xlu0 %v97, 109
  %v1693 = vpop.permute.xlu0 %1692
  %vm1694 = vcmp.lt.s32.totalorder %v103, 109
  %v1695 = vsel %vm1694, %v1691, %v1693
  %v1696 = vsel %vm1694, %v1693, %v1691
  %s1697 = scalar_lea.vmem %s1, 66
  %v1698 = vld [vmem:[%s1697] ss:$8 sm:$0x3]
  %s1699 = scalar_lea.vmem %s1, 163
  %v1700 = vld [vmem:[%s1699] ss:$8 sm:$0x3]
  %v1702 = vlaneseq
  %v1703 = vshrl.u32 %v1702, 7
  %v1704 = vsub.s32 0, %v1703
  %v1705 = vrot.slane %v1698, %v1704
  %v1706 = vlaneseq
  %v1707 = vshrl.u32 %v1706, 7
  %v1708 = vsub.s32 1, %v1707
  %v1709 = vrot.slane %v1698, %v1708
  %v1712 = vmul.f32 %v1695, %v1705
  %v1713 = vmul.f32 %v1696, %v1709
  %v1714 = vadd.f32 %v1688, %v1712
  %v1715 = vadd.f32 %v1689, %v1713
  %v1717 = vlaneseq
  %v1718 = vshrl.u32 %v1717, 7
  %v1719 = vsub.s32 0, %v1718
  %v1720 = vrot.slane %v1700, %v1719
  %v1721 = vlaneseq
  %v1722 = vshrl.u32 %v1721, 7
  %v1723 = vsub.s32 1, %v1722
  %v1724 = vrot.slane %v1700, %v1723
  %v1727 = vmul.f32 %v1695, %v1720
  %v1728 = vmul.f32 %v1696, %v1724
  %v1731 = vrot.slane %v1727, 2
  %v1732 = vrot.slane %v1728, 2
  %v1735 = vadd.f32 %v1714, %v1731
  %v1736 = vadd.f32 %v1715, %v1732
  %1737 = vrot.lane.b32.xlu0 %v96, 99
  %v1738 = vpop.permute.xlu0 %1737
  %1739 = vrot.lane.b32.xlu0 %v97, 99
  %v1740 = vpop.permute.xlu0 %1739
  %vm1741 = vcmp.lt.s32.totalorder %v103, 99
  %v1742 = vsel %vm1741, %v1738, %v1740
  %v1743 = vsel %vm1741, %v1740, %v1738
  %s1744 = scalar_lea.vmem %s1, 67
  %v1745 = vld [vmem:[%s1744] ss:$8 sm:$0x3]
  %s1746 = scalar_lea.vmem %s1, 164
  %v1747 = vld [vmem:[%s1746] ss:$8 sm:$0x3]
  %v1749 = vlaneseq
  %v1750 = vshrl.u32 %v1749, 7
  %v1751 = vsub.s32 0, %v1750
  %v1752 = vrot.slane %v1745, %v1751
  %v1753 = vlaneseq
  %v1754 = vshrl.u32 %v1753, 7
  %v1755 = vsub.s32 1, %v1754
  %v1756 = vrot.slane %v1745, %v1755
  %v1759 = vmul.f32 %v1742, %v1752
  %v1760 = vmul.f32 %v1743, %v1756
  %v1761 = vadd.f32 %v1735, %v1759
  %v1762 = vadd.f32 %v1736, %v1760
  %v1764 = vlaneseq
  %v1765 = vshrl.u32 %v1764, 7
  %v1766 = vsub.s32 0, %v1765
  %v1767 = vrot.slane %v1747, %v1766
  %v1768 = vlaneseq
  %v1769 = vshrl.u32 %v1768, 7
  %v1770 = vsub.s32 1, %v1769
  %v1771 = vrot.slane %v1747, %v1770
  %v1774 = vmul.f32 %v1742, %v1767
  %v1775 = vmul.f32 %v1743, %v1771
  %v1778 = vrot.slane %v1774, 2
  %v1779 = vrot.slane %v1775, 2
  %v1782 = vadd.f32 %v1761, %v1778
  %v1783 = vadd.f32 %v1762, %v1779
  %1784 = vrot.lane.b32.xlu0 %v96, 98
  %v1785 = vpop.permute.xlu0 %1784
  %1786 = vrot.lane.b32.xlu0 %v97, 98
  %v1787 = vpop.permute.xlu0 %1786
  %vm1788 = vcmp.lt.s32.totalorder %v103, 98
  %v1789 = vsel %vm1788, %v1785, %v1787
  %v1790 = vsel %vm1788, %v1787, %v1785
  %s1791 = scalar_lea.vmem %s1, 68
  %v1792 = vld [vmem:[%s1791] ss:$8 sm:$0x3]
  %s1793 = scalar_lea.vmem %s1, 165
  %v1794 = vld [vmem:[%s1793] ss:$8 sm:$0x3]
  %v1796 = vlaneseq
  %v1797 = vshrl.u32 %v1796, 7
  %v1798 = vsub.s32 0, %v1797
  %v1799 = vrot.slane %v1792, %v1798
  %v1800 = vlaneseq
  %v1801 = vshrl.u32 %v1800, 7
  %v1802 = vsub.s32 1, %v1801
  %v1803 = vrot.slane %v1792, %v1802
  %v1806 = vmul.f32 %v1789, %v1799
  %v1807 = vmul.f32 %v1790, %v1803
  %v1808 = vadd.f32 %v1782, %v1806
  %v1809 = vadd.f32 %v1783, %v1807
  %v1811 = vlaneseq
  %v1812 = vshrl.u32 %v1811, 7
  %v1813 = vsub.s32 0, %v1812
  %v1814 = vrot.slane %v1794, %v1813
  %v1815 = vlaneseq
  %v1816 = vshrl.u32 %v1815, 7
  %v1817 = vsub.s32 1, %v1816
  %v1818 = vrot.slane %v1794, %v1817
  %v1821 = vmul.f32 %v1789, %v1814
  %v1822 = vmul.f32 %v1790, %v1818
  %v1825 = vrot.slane %v1821, 2
  %v1826 = vrot.slane %v1822, 2
  %v1829 = vadd.f32 %v1808, %v1825
  %v1830 = vadd.f32 %v1809, %v1826
  %1831 = vrot.lane.b32.xlu0 %v96, 97
  %v1832 = vpop.permute.xlu0 %1831
  %1833 = vrot.lane.b32.xlu0 %v97, 97
  %v1834 = vpop.permute.xlu0 %1833
  %vm1835 = vcmp.lt.s32.totalorder %v103, 97
  %v1836 = vsel %vm1835, %v1832, %v1834
  %v1837 = vsel %vm1835, %v1834, %v1832
  %s1838 = scalar_lea.vmem %s1, 69
  %v1839 = vld [vmem:[%s1838] ss:$8 sm:$0x3]
  %s1840 = scalar_lea.vmem %s1, 166
  %v1841 = vld [vmem:[%s1840] ss:$8 sm:$0x3]
  %v1843 = vlaneseq
  %v1844 = vshrl.u32 %v1843, 7
  %v1845 = vsub.s32 0, %v1844
  %v1846 = vrot.slane %v1839, %v1845
  %v1847 = vlaneseq
  %v1848 = vshrl.u32 %v1847, 7
  %v1849 = vsub.s32 1, %v1848
  %v1850 = vrot.slane %v1839, %v1849
  %v1853 = vmul.f32 %v1836, %v1846
  %v1854 = vmul.f32 %v1837, %v1850
  %v1855 = vadd.f32 %v1829, %v1853
  %v1856 = vadd.f32 %v1830, %v1854
  %v1858 = vlaneseq
  %v1859 = vshrl.u32 %v1858, 7
  %v1860 = vsub.s32 0, %v1859
  %v1861 = vrot.slane %v1841, %v1860
  %v1862 = vlaneseq
  %v1863 = vshrl.u32 %v1862, 7
  %v1864 = vsub.s32 1, %v1863
  %v1865 = vrot.slane %v1841, %v1864
  %v1868 = vmul.f32 %v1836, %v1861
  %v1869 = vmul.f32 %v1837, %v1865
  %v1872 = vrot.slane %v1868, 2
  %v1873 = vrot.slane %v1869, 2
  %v1876 = vadd.f32 %v1855, %v1872
  %v1877 = vadd.f32 %v1856, %v1873
  %1878 = vrot.lane.b32.xlu0 %v96, 96
  %v1879 = vpop.permute.xlu0 %1878
  %1880 = vrot.lane.b32.xlu0 %v97, 96
  %v1881 = vpop.permute.xlu0 %1880
  %vm1882 = vcmp.lt.s32.totalorder %v103, 96
  %v1883 = vsel %vm1882, %v1879, %v1881
  %v1884 = vsel %vm1882, %v1881, %v1879
  %s1885 = scalar_lea.vmem %s1, 70
  %v1886 = vld [vmem:[%s1885] ss:$8 sm:$0x3]
  %s1887 = scalar_lea.vmem %s1, 167
  %v1888 = vld [vmem:[%s1887] ss:$8 sm:$0x3]
  %v1890 = vlaneseq
  %v1891 = vshrl.u32 %v1890, 7
  %v1892 = vsub.s32 0, %v1891
  %v1893 = vrot.slane %v1886, %v1892
  %v1894 = vlaneseq
  %v1895 = vshrl.u32 %v1894, 7
  %v1896 = vsub.s32 1, %v1895
  %v1897 = vrot.slane %v1886, %v1896
  %v1900 = vmul.f32 %v1883, %v1893
  %v1901 = vmul.f32 %v1884, %v1897
  %v1902 = vadd.f32 %v1876, %v1900
  %v1903 = vadd.f32 %v1877, %v1901
  %v1905 = vlaneseq
  %v1906 = vshrl.u32 %v1905, 7
  %v1907 = vsub.s32 0, %v1906
  %v1908 = vrot.slane %v1888, %v1907
  %v1909 = vlaneseq
  %v1910 = vshrl.u32 %v1909, 7
  %v1911 = vsub.s32 1, %v1910
  %v1912 = vrot.slane %v1888, %v1911
  %v1915 = vmul.f32 %v1883, %v1908
  %v1916 = vmul.f32 %v1884, %v1912
  %v1919 = vrot.slane %v1915, 2
  %v1920 = vrot.slane %v1916, 2
  %v1923 = vadd.f32 %v1902, %v1919
  %v1924 = vadd.f32 %v1903, %v1920
  %1925 = vrot.lane.b32.xlu0 %v96, 95
  %v1926 = vpop.permute.xlu0 %1925
  %1927 = vrot.lane.b32.xlu0 %v97, 95
  %v1928 = vpop.permute.xlu0 %1927
  %vm1929 = vcmp.lt.s32.totalorder %v103, 95
  %v1930 = vsel %vm1929, %v1926, %v1928
  %v1931 = vsel %vm1929, %v1928, %v1926
  %s1932 = scalar_lea.vmem %s1, 71
  %v1933 = vld [vmem:[%s1932] ss:$8 sm:$0x3]
  %s1934 = scalar_lea.vmem %s1, 176
  %v1935 = vld [vmem:[%s1934] ss:$8 sm:$0x3]
  %v1937 = vlaneseq
  %v1938 = vshrl.u32 %v1937, 7
  %v1939 = vsub.s32 0, %v1938
  %v1940 = vrot.slane %v1933, %v1939
  %v1941 = vlaneseq
  %v1942 = vshrl.u32 %v1941, 7
  %v1943 = vsub.s32 1, %v1942
  %v1944 = vrot.slane %v1933, %v1943
  %v1947 = vmul.f32 %v1930, %v1940
  %v1948 = vmul.f32 %v1931, %v1944
  %v1949 = vadd.f32 %v1923, %v1947
  %v1950 = vadd.f32 %v1924, %v1948
  %v1952 = vlaneseq
  %v1953 = vshrl.u32 %v1952, 7
  %v1954 = vsub.s32 0, %v1953
  %v1955 = vrot.slane %v1935, %v1954
  %v1956 = vlaneseq
  %v1957 = vshrl.u32 %v1956, 7
  %v1958 = vsub.s32 1, %v1957
  %v1959 = vrot.slane %v1935, %v1958
  %v1962 = vmul.f32 %v1930, %v1955
  %v1963 = vmul.f32 %v1931, %v1959
  %v1966 = vrot.slane %v1962, 2
  %v1967 = vrot.slane %v1963, 2
  %v1970 = vadd.f32 %v1949, %v1966
  %v1971 = vadd.f32 %v1950, %v1967
  %1972 = vrot.lane.b32.xlu0 %v96, 94
  %v1973 = vpop.permute.xlu0 %1972
  %1974 = vrot.lane.b32.xlu0 %v97, 94
  %v1975 = vpop.permute.xlu0 %1974
  %vm1976 = vcmp.lt.s32.totalorder %v103, 94
  %v1977 = vsel %vm1976, %v1973, %v1975
  %v1978 = vsel %vm1976, %v1975, %v1973
  %s1979 = scalar_lea.vmem %s1, 80
  %v1980 = vld [vmem:[%s1979] ss:$8 sm:$0x3]
  %s1981 = scalar_lea.vmem %s1, 177
  %v1982 = vld [vmem:[%s1981] ss:$8 sm:$0x3]
  %v1984 = vlaneseq
  %v1985 = vshrl.u32 %v1984, 7
  %v1986 = vsub.s32 0, %v1985
  %v1987 = vrot.slane %v1980, %v1986
  %v1988 = vlaneseq
  %v1989 = vshrl.u32 %v1988, 7
  %v1990 = vsub.s32 1, %v1989
  %v1991 = vrot.slane %v1980, %v1990
  %v1994 = vmul.f32 %v1977, %v1987
  %v1995 = vmul.f32 %v1978, %v1991
  %v1996 = vadd.f32 %v1970, %v1994
  %v1997 = vadd.f32 %v1971, %v1995
  %v1999 = vlaneseq
  %v2000 = vshrl.u32 %v1999, 7
  %v2001 = vsub.s32 0, %v2000
  %v2002 = vrot.slane %v1982, %v2001
  %v2003 = vlaneseq
  %v2004 = vshrl.u32 %v2003, 7
  %v2005 = vsub.s32 1, %v2004
  %v2006 = vrot.slane %v1982, %v2005
  %v2009 = vmul.f32 %v1977, %v2002
  %v2010 = vmul.f32 %v1978, %v2006
  %v2013 = vrot.slane %v2009, 2
  %v2014 = vrot.slane %v2010, 2
  %v2017 = vadd.f32 %v1996, %v2013
  %v2018 = vadd.f32 %v1997, %v2014
  %2019 = vrot.lane.b32.xlu0 %v96, 93
  %v2020 = vpop.permute.xlu0 %2019
  %2021 = vrot.lane.b32.xlu0 %v97, 93
  %v2022 = vpop.permute.xlu0 %2021
  %vm2023 = vcmp.lt.s32.totalorder %v103, 93
  %v2024 = vsel %vm2023, %v2020, %v2022
  %v2025 = vsel %vm2023, %v2022, %v2020
  %s2026 = scalar_lea.vmem %s1, 81
  %v2027 = vld [vmem:[%s2026] ss:$8 sm:$0x3]
  %s2028 = scalar_lea.vmem %s1, 178
  %v2029 = vld [vmem:[%s2028] ss:$8 sm:$0x3]
  %v2031 = vlaneseq
  %v2032 = vshrl.u32 %v2031, 7
  %v2033 = vsub.s32 0, %v2032
  %v2034 = vrot.slane %v2027, %v2033
  %v2035 = vlaneseq
  %v2036 = vshrl.u32 %v2035, 7
  %v2037 = vsub.s32 1, %v2036
  %v2038 = vrot.slane %v2027, %v2037
  %v2041 = vmul.f32 %v2024, %v2034
  %v2042 = vmul.f32 %v2025, %v2038
  %v2043 = vadd.f32 %v2017, %v2041
  %v2044 = vadd.f32 %v2018, %v2042
  %v2046 = vlaneseq
  %v2047 = vshrl.u32 %v2046, 7
  %v2048 = vsub.s32 0, %v2047
  %v2049 = vrot.slane %v2029, %v2048
  %v2050 = vlaneseq
  %v2051 = vshrl.u32 %v2050, 7
  %v2052 = vsub.s32 1, %v2051
  %v2053 = vrot.slane %v2029, %v2052
  %v2056 = vmul.f32 %v2024, %v2049
  %v2057 = vmul.f32 %v2025, %v2053
  %v2060 = vrot.slane %v2056, 2
  %v2061 = vrot.slane %v2057, 2
  %v2064 = vadd.f32 %v2043, %v2060
  %v2065 = vadd.f32 %v2044, %v2061
  %2066 = vrot.lane.b32.xlu0 %v96, 83
  %v2067 = vpop.permute.xlu0 %2066
  %2068 = vrot.lane.b32.xlu0 %v97, 83
  %v2069 = vpop.permute.xlu0 %2068
  %vm2070 = vcmp.lt.s32.totalorder %v103, 83
  %v2071 = vsel %vm2070, %v2067, %v2069
  %v2072 = vsel %vm2070, %v2069, %v2067
  %s2073 = scalar_lea.vmem %s1, 82
  %v2074 = vld [vmem:[%s2073] ss:$8 sm:$0x3]
  %s2075 = scalar_lea.vmem %s1, 179
  %v2076 = vld [vmem:[%s2075] ss:$8 sm:$0x3]
  %v2078 = vlaneseq
  %v2079 = vshrl.u32 %v2078, 7
  %v2080 = vsub.s32 0, %v2079
  %v2081 = vrot.slane %v2074, %v2080
  %v2082 = vlaneseq
  %v2083 = vshrl.u32 %v2082, 7
  %v2084 = vsub.s32 1, %v2083
  %v2085 = vrot.slane %v2074, %v2084
  %v2088 = vmul.f32 %v2071, %v2081
  %v2089 = vmul.f32 %v2072, %v2085
  %v2090 = vadd.f32 %v2064, %v2088
  %v2091 = vadd.f32 %v2065, %v2089
  %v2093 = vlaneseq
  %v2094 = vshrl.u32 %v2093, 7
  %v2095 = vsub.s32 0, %v2094
  %v2096 = vrot.slane %v2076, %v2095
  %v2097 = vlaneseq
  %v2098 = vshrl.u32 %v2097, 7
  %v2099 = vsub.s32 1, %v2098
  %v2100 = vrot.slane %v2076, %v2099
  %v2103 = vmul.f32 %v2071, %v2096
  %v2104 = vmul.f32 %v2072, %v2100
  %v2107 = vrot.slane %v2103, 2
  %v2108 = vrot.slane %v2104, 2
  %v2111 = vadd.f32 %v2090, %v2107
  %v2112 = vadd.f32 %v2091, %v2108
  %2113 = vrot.lane.b32.xlu0 %v96, 82
  %v2114 = vpop.permute.xlu0 %2113
  %2115 = vrot.lane.b32.xlu0 %v97, 82
  %v2116 = vpop.permute.xlu0 %2115
  %vm2117 = vcmp.lt.s32.totalorder %v103, 82
  %v2118 = vsel %vm2117, %v2114, %v2116
  %v2119 = vsel %vm2117, %v2116, %v2114
  %s2120 = scalar_lea.vmem %s1, 83
  %v2121 = vld [vmem:[%s2120] ss:$8 sm:$0x3]
  %s2122 = scalar_lea.vmem %s1, 180
  %v2123 = vld [vmem:[%s2122] ss:$8 sm:$0x3]
  %v2125 = vlaneseq
  %v2126 = vshrl.u32 %v2125, 7
  %v2127 = vsub.s32 0, %v2126
  %v2128 = vrot.slane %v2121, %v2127
  %v2129 = vlaneseq
  %v2130 = vshrl.u32 %v2129, 7
  %v2131 = vsub.s32 1, %v2130
  %v2132 = vrot.slane %v2121, %v2131
  %v2135 = vmul.f32 %v2118, %v2128
  %v2136 = vmul.f32 %v2119, %v2132
  %v2137 = vadd.f32 %v2111, %v2135
  %v2138 = vadd.f32 %v2112, %v2136
  %v2140 = vlaneseq
  %v2141 = vshrl.u32 %v2140, 7
  %v2142 = vsub.s32 0, %v2141
  %v2143 = vrot.slane %v2123, %v2142
  %v2144 = vlaneseq
  %v2145 = vshrl.u32 %v2144, 7
  %v2146 = vsub.s32 1, %v2145
  %v2147 = vrot.slane %v2123, %v2146
  %v2150 = vmul.f32 %v2118, %v2143
  %v2151 = vmul.f32 %v2119, %v2147
  %v2154 = vrot.slane %v2150, 2
  %v2155 = vrot.slane %v2151, 2
  %v2158 = vadd.f32 %v2137, %v2154
  %v2159 = vadd.f32 %v2138, %v2155
  %2160 = vrot.lane.b32.xlu0 %v96, 81
  %v2161 = vpop.permute.xlu0 %2160
  %2162 = vrot.lane.b32.xlu0 %v97, 81
  %v2163 = vpop.permute.xlu0 %2162
  %vm2164 = vcmp.lt.s32.totalorder %v103, 81
  %v2165 = vsel %vm2164, %v2161, %v2163
  %v2166 = vsel %vm2164, %v2163, %v2161
  %s2167 = scalar_lea.vmem %s1, 84
  %v2168 = vld [vmem:[%s2167] ss:$8 sm:$0x3]
  %s2169 = scalar_lea.vmem %s1, 181
  %v2170 = vld [vmem:[%s2169] ss:$8 sm:$0x3]
  %v2172 = vlaneseq
  %v2173 = vshrl.u32 %v2172, 7
  %v2174 = vsub.s32 0, %v2173
  %v2175 = vrot.slane %v2168, %v2174
  %v2176 = vlaneseq
  %v2177 = vshrl.u32 %v2176, 7
  %v2178 = vsub.s32 1, %v2177
  %v2179 = vrot.slane %v2168, %v2178
  %v2182 = vmul.f32 %v2165, %v2175
  %v2183 = vmul.f32 %v2166, %v2179
  %v2184 = vadd.f32 %v2158, %v2182
  %v2185 = vadd.f32 %v2159, %v2183
  %v2187 = vlaneseq
  %v2188 = vshrl.u32 %v2187, 7
  %v2189 = vsub.s32 0, %v2188
  %v2190 = vrot.slane %v2170, %v2189
  %v2191 = vlaneseq
  %v2192 = vshrl.u32 %v2191, 7
  %v2193 = vsub.s32 1, %v2192
  %v2194 = vrot.slane %v2170, %v2193
  %v2197 = vmul.f32 %v2165, %v2190
  %v2198 = vmul.f32 %v2166, %v2194
  %v2201 = vrot.slane %v2197, 2
  %v2202 = vrot.slane %v2198, 2
  %v2205 = vadd.f32 %v2184, %v2201
  %v2206 = vadd.f32 %v2185, %v2202
  %2207 = vrot.lane.b32.xlu0 %v96, 80
  %v2208 = vpop.permute.xlu0 %2207
  %2209 = vrot.lane.b32.xlu0 %v97, 80
  %v2210 = vpop.permute.xlu0 %2209
  %vm2211 = vcmp.lt.s32.totalorder %v103, 80
  %v2212 = vsel %vm2211, %v2208, %v2210
  %v2213 = vsel %vm2211, %v2210, %v2208
  %s2214 = scalar_lea.vmem %s1, 85
  %v2215 = vld [vmem:[%s2214] ss:$8 sm:$0x3]
  %s2216 = scalar_lea.vmem %s1, 182
  %v2217 = vld [vmem:[%s2216] ss:$8 sm:$0x3]
  %v2219 = vlaneseq
  %v2220 = vshrl.u32 %v2219, 7
  %v2221 = vsub.s32 0, %v2220
  %v2222 = vrot.slane %v2215, %v2221
  %v2223 = vlaneseq
  %v2224 = vshrl.u32 %v2223, 7
  %v2225 = vsub.s32 1, %v2224
  %v2226 = vrot.slane %v2215, %v2225
  %v2229 = vmul.f32 %v2212, %v2222
  %v2230 = vmul.f32 %v2213, %v2226
  %v2231 = vadd.f32 %v2205, %v2229
  %v2232 = vadd.f32 %v2206, %v2230
  %v2234 = vlaneseq
  %v2235 = vshrl.u32 %v2234, 7
  %v2236 = vsub.s32 0, %v2235
  %v2237 = vrot.slane %v2217, %v2236
  %v2238 = vlaneseq
  %v2239 = vshrl.u32 %v2238, 7
  %v2240 = vsub.s32 1, %v2239
  %v2241 = vrot.slane %v2217, %v2240
  %v2244 = vmul.f32 %v2212, %v2237
  %v2245 = vmul.f32 %v2213, %v2241
  %v2248 = vrot.slane %v2244, 2
  %v2249 = vrot.slane %v2245, 2
  %v2252 = vadd.f32 %v2231, %v2248
  %v2253 = vadd.f32 %v2232, %v2249
  %2254 = vrot.lane.b32.xlu0 %v96, 79
  %v2255 = vpop.permute.xlu0 %2254
  %2256 = vrot.lane.b32.xlu0 %v97, 79
  %v2257 = vpop.permute.xlu0 %2256
  %vm2258 = vcmp.lt.s32.totalorder %v103, 79
  %v2259 = vsel %vm2258, %v2255, %v2257
  %v2260 = vsel %vm2258, %v2257, %v2255
  %s2261 = scalar_lea.vmem %s1, 86
  %v2262 = vld [vmem:[%s2261] ss:$8 sm:$0x3]
  %s2263 = scalar_lea.vmem %s1, 183
  %v2264 = vld [vmem:[%s2263] ss:$8 sm:$0x3]
  %v2266 = vlaneseq
  %v2267 = vshrl.u32 %v2266, 7
  %v2268 = vsub.s32 0, %v2267
  %v2269 = vrot.slane %v2262, %v2268
  %v2270 = vlaneseq
  %v2271 = vshrl.u32 %v2270, 7
  %v2272 = vsub.s32 1, %v2271
  %v2273 = vrot.slane %v2262, %v2272
  %v2276 = vmul.f32 %v2259, %v2269
  %v2277 = vmul.f32 %v2260, %v2273
  %v2278 = vadd.f32 %v2252, %v2276
  %v2279 = vadd.f32 %v2253, %v2277
  %v2281 = vlaneseq
  %v2282 = vshrl.u32 %v2281, 7
  %v2283 = vsub.s32 0, %v2282
  %v2284 = vrot.slane %v2264, %v2283
  %v2285 = vlaneseq
  %v2286 = vshrl.u32 %v2285, 7
  %v2287 = vsub.s32 1, %v2286
  %v2288 = vrot.slane %v2264, %v2287
  %v2291 = vmul.f32 %v2259, %v2284
  %v2292 = vmul.f32 %v2260, %v2288
  %v2295 = vrot.slane %v2291, 2
  %v2296 = vrot.slane %v2292, 2
  %v2299 = vadd.f32 %v2278, %v2295
  %v2300 = vadd.f32 %v2279, %v2296
  %2301 = vrot.lane.b32.xlu0 %v96, 78
  %v2302 = vpop.permute.xlu0 %2301
  %2303 = vrot.lane.b32.xlu0 %v97, 78
  %v2304 = vpop.permute.xlu0 %2303
  %vm2305 = vcmp.lt.s32.totalorder %v103, 78
  %v2306 = vsel %vm2305, %v2302, %v2304
  %v2307 = vsel %vm2305, %v2304, %v2302
  %s2308 = scalar_lea.vmem %s1, 87
  %v2309 = vld [vmem:[%s2308] ss:$8 sm:$0x3]
  %s2310 = scalar_lea.vmem %s1, 192
  %v2311 = vld [vmem:[%s2310] ss:$8 sm:$0x3]
  %v2313 = vlaneseq
  %v2314 = vshrl.u32 %v2313, 7
  %v2315 = vsub.s32 0, %v2314
  %v2316 = vrot.slane %v2309, %v2315
  %v2317 = vlaneseq
  %v2318 = vshrl.u32 %v2317, 7
  %v2319 = vsub.s32 1, %v2318
  %v2320 = vrot.slane %v2309, %v2319
  %v2323 = vmul.f32 %v2306, %v2316
  %v2324 = vmul.f32 %v2307, %v2320
  %v2325 = vadd.f32 %v2299, %v2323
  %v2326 = vadd.f32 %v2300, %v2324
  %v2328 = vlaneseq
  %v2329 = vshrl.u32 %v2328, 7
  %v2330 = vsub.s32 0, %v2329
  %v2331 = vrot.slane %v2311, %v2330
  %v2332 = vlaneseq
  %v2333 = vshrl.u32 %v2332, 7
  %v2334 = vsub.s32 1, %v2333
  %v2335 = vrot.slane %v2311, %v2334
  %v2338 = vmul.f32 %v2306, %v2331
  %v2339 = vmul.f32 %v2307, %v2335
  %v2342 = vrot.slane %v2338, 2
  %v2343 = vrot.slane %v2339, 2
  %v2346 = vadd.f32 %v2325, %v2342
  %v2347 = vadd.f32 %v2326, %v2343
  %2348 = vrot.lane.b32.xlu0 %v96, 77
  %v2349 = vpop.permute.xlu0 %2348
  %2350 = vrot.lane.b32.xlu0 %v97, 77
  %v2351 = vpop.permute.xlu0 %2350
  %vm2352 = vcmp.lt.s32.totalorder %v103, 77
  %v2353 = vsel %vm2352, %v2349, %v2351
  %v2354 = vsel %vm2352, %v2351, %v2349
  %s2355 = scalar_lea.vmem %s1, 96
  %v2356 = vld [vmem:[%s2355] ss:$8 sm:$0x3]
  %s2357 = scalar_lea.vmem %s1, 193
  %v2358 = vld [vmem:[%s2357] ss:$8 sm:$0x3]
  %v2360 = vlaneseq
  %v2361 = vshrl.u32 %v2360, 7
  %v2362 = vsub.s32 0, %v2361
  %v2363 = vrot.slane %v2356, %v2362
  %v2364 = vlaneseq
  %v2365 = vshrl.u32 %v2364, 7
  %v2366 = vsub.s32 1, %v2365
  %v2367 = vrot.slane %v2356, %v2366
  %v2370 = vmul.f32 %v2353, %v2363
  %v2371 = vmul.f32 %v2354, %v2367
  %v2372 = vadd.f32 %v2346, %v2370
  %v2373 = vadd.f32 %v2347, %v2371
  %v2375 = vlaneseq
  %v2376 = vshrl.u32 %v2375, 7
  %v2377 = vsub.s32 0, %v2376
  %v2378 = vrot.slane %v2358, %v2377
  %v2379 = vlaneseq
  %v2380 = vshrl.u32 %v2379, 7
  %v2381 = vsub.s32 1, %v2380
  %v2382 = vrot.slane %v2358, %v2381
  %v2385 = vmul.f32 %v2353, %v2378
  %v2386 = vmul.f32 %v2354, %v2382
  %v2389 = vrot.slane %v2385, 2
  %v2390 = vrot.slane %v2386, 2
  %v2393 = vadd.f32 %v2372, %v2389
  %v2394 = vadd.f32 %v2373, %v2390
  %v2395 = vxor.u32 %v2393, 2147483648
  %v2396 = vxor.u32 %v2394, 2147483648
  %v2397 = vmul.f32 %v2395, 1.442695
  %v2398 = vpow.pop %v2397
  %v2399 = vmul.f32 %v2396, 1.442695
  %v2400 = vpow.pop %v2399
  %v2401 = vadd.f32 %v2398, 1.0
  %v2402 = vadd.f32 %v2400, 1.0
  %v2403 = vrcp.pop %v2401
  %v2404 = vmul.f32 1.0, %v2403
  %v2405 = vrcp.pop %v2402
  %v2406 = vmul.f32 1.0, %v2405
  %v2409 = vcombine.low %v2404, %v2406
  %v2411 = vunpack.c.l.s4 1983009808
  %v2412 = vunpack.c.0.s8 %v2411
  %v2413 = vlaneseq
  %v2414 = vshrl.u32 %v2413, 7
  %v2415 = vsub.s32 %v2412, %v2414
  %v2416 = vrot.slane %v2409, %v2415
  %s2418 = smul.u32 0, 2
  %s2419 = smul.addr %s2418, 2
  %s2420 = scalar_lea.vmem %s2, %s2419
  %2421 = vst [vmem:[%s2420] sm:$0xf] %v2416
  // Predicated region
  $region10: #{spatial_attention.1} parent=0 // pred_check
    _
  $region11: #{spatial_attention.1} parent=0 // pred_check_branch
    %2423 = sbr.rel (0) target = $region13
  $region12: #{spatial_attention.1} parent=0 // pred_region
    _
  $region13: #{spatial_attention.1} parent=0 // pred_fallthru
    _
  // Predicated region
  $region14: #{spatial_attention.1} parent=0 // pred_check
    _
  $region15: #{spatial_attention.1} parent=0 // pred_check_branch
    %2425 = sbr.rel (0) target = $region17
  $region16: #{spatial_attention.1} parent=0 // pred_region
    _
  $region17: #{spatial_attention.1} parent=0 // pred_fallthru
    _

</llo_original>
